<compile_context>
chip_gen: v6e
topology: v6e:2x2x1
jax: 0.10.0
libtpu: 0.0.40
codegen_flags: <defaults>
</compile_context>

<pallas_src>
import math

import numpy as np
import jax
import jax.numpy as jnp
from jax import lax
from jax.experimental import pallas as pl
from jax.experimental.pallas import tpu as pltpu

# ----- model config (small, consistent with the module) -----
B = 2            # batch
T = 8            # sequence length == block_size
C = 32           # n_embd
N_HEAD = 4
HEAD_SIZE = C // N_HEAD
HIDDEN = 4 * C
EPS = 1e-5
BT = B * T
INV_SQRT2 = 0.7071067811865476

# ----- trace-time constant: block-causal additive mask (0 / -inf) -----
# Row index = h*BT + b*T + t, column index = b'*T + t'.  Allowed iff
# (b == b') and (t' <= t), shared by every head.
_rows = np.arange(N_HEAD * BT) % BT
_cols = np.arange(BT)
_allowed = ((_rows[:, None] // T) == (_cols[None, :] // T)) & \
           ((_cols[None, :] % T) <= (_rows[:, None] % T))
MASK_BIAS_NP = np.where(_allowed, 0.0, -np.inf).astype(np.float32)   # (64, 16)


def block_kernel(x_ref, w1_ref, w2_ref, bias_ref, o_ref):
    x = x_ref[...]                                   # (BT, C)

    # Packed weights, all slices tile-aligned.
    wfc = w1_ref[:, 0:HIDDEN]                        # (C, 4C), ln_2.w folded in
    wqkv = w1_ref[:, HIDDEN:HIDDEN + 3 * C]          # (C, 3C), ln_1.w + q-scale folded in
    wpr = w2_ref[0:HIDDEN, :]                        # (4C, C)
    wo = w2_ref[HIDDEN:HIDDEN + C, :]                # (C, C)

    # ---- ln_1 (weight folded into wqkv) ----
    mu = jnp.mean(x, axis=-1, keepdims=True)
    xc = x - mu
    h1 = xc * lax.rsqrt(jnp.mean(xc * xc, axis=-1, keepdims=True) + EPS)

    # ---- fused QKV projection (bias=False), Q columns pre-scaled ----
    qkv = jnp.dot(h1, wqkv, preferred_element_type=jnp.float32)      # (BT, 3C)

    # ---- attention scores for all heads, row-stacked (sublane-aligned) ----
    dn = (((1,), (1,)), ((), ()))                    # q @ k^T (contract last dims)
    score_blocks = []
    for h in range(N_HEAD):
        qh = qkv[:, h * HEAD_SIZE:(h + 1) * HEAD_SIZE]
        kh = qkv[:, C + h * HEAD_SIZE:C + (h + 1) * HEAD_SIZE]
        score_blocks.append(
            lax.dot_general(qh, kh, dn, preferred_element_type=jnp.float32))
    s = jnp.concatenate(score_blocks, axis=0) + bias_ref[...]        # (N_HEAD*BT, BT)

    # ---- single softmax over all heads/batches (attn_dropout is identity) ----
    m = jnp.max(s, axis=-1, keepdims=True)
    e = jnp.exp(s - m)
    p = e * pl.reciprocal(jnp.sum(e, axis=-1, keepdims=True), approx=True)

    # ---- per-head weighted values, projected and accumulated (no lane concat) ----
    attn = None
    for h in range(N_HEAD):
        ph = p[h * BT:(h + 1) * BT, :]                               # sublane-aligned
        vh = qkv[:, 2 * C + h * HEAD_SIZE:2 * C + (h + 1) * HEAD_SIZE]
        pv = jnp.dot(ph, vh, preferred_element_type=jnp.float32)     # (BT, HS)
        contrib = jnp.dot(pv, wo[h * HEAD_SIZE:(h + 1) * HEAD_SIZE, :],
                          preferred_element_type=jnp.float32)        # (BT, C)
        attn = contrib if attn is None else attn + contrib

    # residual 1 (resid_dropout is identity)
    x2 = x + attn

    # ---- ln_2 (weight folded into wfc) + MLP ----
    mu2 = jnp.mean(x2, axis=-1, keepdims=True)
    xc2 = x2 - mu2
    h2 = xc2 * lax.rsqrt(jnp.mean(xc2 * xc2, axis=-1, keepdims=True) + EPS)
    ff = jnp.dot(h2, wfc, preferred_element_type=jnp.float32)        # (BT, 4C)
    ff = 0.5 * ff * (1.0 + lax.erf(ff * INV_SQRT2))                  # exact GELU
    mlp_out = jnp.dot(ff, wpr, preferred_element_type=jnp.float32)

    o_ref[...] = x2 + mlp_out


def pack_kernel_params(params):
    """Host-side, one-time packing: fold LN weights + attention scale into the
    matmul weights and concatenate into two tile-aligned operands."""
    ln_w, wqkv_t, wo_t, wfc_t, wpr_t = (np.asarray(p, np.float32) for p in params)
    scale = 1.0 / math.sqrt(HEAD_SIZE)

    wqkv_f = wqkv_t * ln_w[0][:, None]           # fold ln_1.weight into rows
    wqkv_f = wqkv_f.copy()
    wqkv_f[:, :C] *= scale                       # fold 1/sqrt(head_size) into Q cols
    wfc_f = wfc_t * ln_w[1][:, None]             # fold ln_2.weight into rows

    w1 = np.concatenate([wfc_f, wqkv_f], axis=1).astype(np.float32)   # (C, 4C+3C)
    w2 = np.concatenate([wpr_t, wo_t], axis=0).astype(np.float32)     # (4C+C, C)
    return jnp.asarray(w1), jnp.asarray(w2), jnp.asarray(MASK_BIAS_NP)


def gpt_block(x, packed):
    w1, w2, bias = packed
    x_flat = x.reshape(BT, C)

    matmul_flops = (
        2 * BT * C * (3 * C)                       # fused qkv projection
        + 2 * (2 * N_HEAD * BT * BT * HEAD_SIZE)   # scores + p@v
        + 2 * BT * C * C                           # attention output projection
        + 2 * BT * C * HIDDEN                      # mlp c_fc
        + 2 * BT * HIDDEN * C)                     # mlp c_proj
    transcendentals = N_HEAD * BT * BT + BT * HIDDEN + 2 * BT + N_HEAD * BT
    bytes_accessed = 4 * (BT * C                   # x in
                          + BT * C                 # output write
                          + C * (3 * C + HIDDEN)   # w1
                          + (HIDDEN + C) * C       # w2
                          + N_HEAD * BT * BT)      # mask bias

    out_flat = pl.pallas_call(
        block_kernel,
        out_shape=jax.ShapeDtypeStruct((BT, C), jnp.float32),
        cost_estimate=pl.CostEstimate(
            flops=matmul_flops,
            transcendentals=transcendentals,
            bytes_accessed=bytes_accessed),
        compiler_params=pltpu.CompilerParams(
            vmem_limit_bytes=32 * 1024 * 1024),
    )(x_flat, w1, w2, bias)
    return out_flat.reshape(B, T, C)


def reference_block(x, params):
    ln_w, wqkv_t, wo_t, wfc_t, wpr_t = params

    def ln(v, w):
        mu = jnp.mean(v, axis=-1, keepdims=True)
        var = jnp.mean((v - mu) ** 2, axis=-1, keepdims=True)
        return (v - mu) / jnp.sqrt(var + EPS) * w

    h1 = ln(x, ln_w[0])
    qkv = h1 @ wqkv_t
    q, k, v = qkv[..., :C], qkv[..., C:2 * C], qkv[..., 2 * C:]
    qh = q.reshape(B, T, N_HEAD, HEAD_SIZE).transpose(0, 2, 1, 3)
    kh = k.reshape(B, T, N_HEAD, HEAD_SIZE).transpose(0, 2, 1, 3)
    vh = v.reshape(B, T, N_HEAD, HEAD_SIZE).transpose(0, 2, 1, 3)
    aff = jnp.einsum("bhqd,bhkd->bhqk", qh, kh) / math.sqrt(HEAD_SIZE)
    mask = jnp.tril(jnp.ones((T, T), dtype=bool))
    aff = jnp.where(mask, aff, -jnp.inf)
    p = jax.nn.softmax(aff, axis=-1)
    o = jnp.einsum("bhqk,bhkd->bhqd", p, vh).transpose(0, 2, 1, 3).reshape(B, T, C)
    x2 = x + o @ wo_t
    h2 = ln(x2, ln_w[1])
    ff = h2 @ wfc_t
    g = 0.5 * ff * (1.0 + lax.erf(ff / jnp.sqrt(2.0)))
    return x2 + g @ wpr_t


def make_params(key):
    ks = jax.random.split(key, 5)
    std = 0.02
    # ln_1.weight / ln_2.weight packed into one (2, C) array.  The module
    # initializes them to 1; perturb slightly so the weight-folding path is
    # actually exercised by the parity check (same forward semantics).
    ln_w = 1.0 + 0.05 * jax.random.normal(ks[4], (2, C), jnp.float32)
    # c_attn.weight is (3C, C) in PyTorch; x @ W.T == x @ wqkv_t with q|k|v
    # occupying columns [0,C), [C,2C), [2C,3C) (head h at cols h*HEAD_SIZE...).
    w_attn = std * jax.random.normal(ks[0], (3 * C, C), jnp.float32)
    wqkv_t = w_attn.T                                              # (C, 3C)
    wo_t = (std * jax.random.normal(ks[1], (C, C), jnp.float32)).T
    wfc_t = (std * jax.random.normal(ks[2], (HIDDEN, C), jnp.float32)).T
    wpr_t = (std * jax.random.normal(ks[3], (C, HIDDEN), jnp.float32)).T
    return (ln_w, wqkv_t, wo_t, wfc_t, wpr_t)


if __name__ == "__main__":
    key = jax.random.PRNGKey(0)
    kx, kp = jax.random.split(key)
    x = jax.random.normal(kx, (B, T, C), jnp.float32)
    params = make_params(kp)
    packed = pack_kernel_params(params)        # one-time host-side packing

    out = jax.block_until_ready(gpt_block(x, packed))
    ref = reference_block(x, params)

    assert out.shape == (B, T, C)
    err = float(jnp.max(jnp.abs(out - ref)))
    assert jnp.allclose(out, ref, rtol=1e-4, atol=1e-4), err
    print("KERNEL_OK")
</pallas_src>

<mosaic_0001>
module attributes {stable_mosaic.version = 11 : i64} {
  func.func @block_kernel(%arg0: memref<16x32xf32, #tpu.memory_space<vmem>>, %arg1: memref<32x224xf32, #tpu.memory_space<vmem>>, %arg2: memref<160x32xf32, #tpu.memory_space<vmem>>, %arg3: memref<64x16xf32, #tpu.memory_space<vmem>>, %arg4: memref<16x32xf32, #tpu.memory_space<vmem>>) attributes {dimension_semantics = [], scalar_prefetch = 0 : i64, scratch_operands = 0 : i64, tpu.core_type = #tpu.core_type<tc>} {
    %c0 = arith.constant 0 : index
    %c0_0 = arith.constant 0 : index
    %0 = vector.load %arg0[%c0, %c0_0] : memref<16x32xf32, #tpu.memory_space<vmem>>, vector<16x32xf32>
    %c0_1 = arith.constant 0 : index
    %c0_2 = arith.constant 0 : index
    %1 = vector.load %arg1[%c0_1, %c0_2] : memref<32x224xf32, #tpu.memory_space<vmem>>, vector<32x128xf32>
    %c0_3 = arith.constant 0 : index
    %c128 = arith.constant 128 : index
    %2 = vector.load %arg1[%c0_3, %c128] : memref<32x224xf32, #tpu.memory_space<vmem>>, vector<32x96xf32>
    %c0_4 = arith.constant 0 : index
    %c0_5 = arith.constant 0 : index
    %3 = vector.load %arg2[%c0_4, %c0_5] : memref<160x32xf32, #tpu.memory_space<vmem>>, vector<128x32xf32>
    %c128_6 = arith.constant 128 : index
    %c0_7 = arith.constant 0 : index
    %4 = vector.load %arg2[%c128_6, %c0_7] : memref<160x32xf32, #tpu.memory_space<vmem>>, vector<32x32xf32>
    %cst = arith.constant dense<0.000000e+00> : vector<16xf32>
    %5 = vector.multi_reduction <add>, %0, %cst [1] : vector<16x32xf32> to vector<16xf32>
    %6 = vector.shape_cast %5 : vector<16xf32> to vector<16x1xf32>
    %cst_8 = arith.constant 3.200000e+01 : f32
    %7 = vector.broadcast %cst_8 : f32 to vector<16x1xf32>
    %8 = arith.divf %6, %7 : vector<16x1xf32>
    %9 = vector.broadcast %8 : vector<16x1xf32> to vector<16x32xf32>
    %10 = arith.subf %0, %9 : vector<16x32xf32>
    %11 = arith.mulf %10, %10 : vector<16x32xf32>
    %cst_9 = arith.constant dense<0.000000e+00> : vector<16xf32>
    %12 = vector.multi_reduction <add>, %11, %cst_9 [1] : vector<16x32xf32> to vector<16xf32>
    %13 = vector.shape_cast %12 : vector<16xf32> to vector<16x1xf32>
    %cst_10 = arith.constant 3.200000e+01 : f32
    %14 = vector.broadcast %cst_10 : f32 to vector<16x1xf32>
    %15 = arith.divf %13, %14 : vector<16x1xf32>
    %cst_11 = arith.constant 9.99999974E-6 : f32
    %16 = vector.broadcast %cst_11 : f32 to vector<16x1xf32>
    %17 = arith.addf %15, %16 : vector<16x1xf32>
    %18 = math.rsqrt %17 : vector<16x1xf32>
    %19 = vector.broadcast %18 : vector<16x1xf32> to vector<16x32xf32>
    %20 = arith.mulf %10, %19 : vector<16x32xf32>
    %cst_12 = arith.constant dense<0.000000e+00> : vector<16x96xf32>
    %21 = tpu.matmul %20, %2, %cst_12 {dimension_numbers = #tpu.dot_dimension_numbers<[1], [0], [0], [1], [0, 0, 1, 1], [], []>} : vector<16x32xf32>, vector<32x96xf32>, vector<16x96xf32> -> vector<16x96xf32>
    %22 = vector.extract_strided_slice %21 {offsets = [0, 0], sizes = [16, 8], strides = [1, 1]} : vector<16x96xf32> to vector<16x8xf32>
    %23 = vector.extract_strided_slice %21 {offsets = [0, 32], sizes = [16, 8], strides = [1, 1]} : vector<16x96xf32> to vector<16x8xf32>
    %cst_13 = arith.constant dense<0.000000e+00> : vector<16x16xf32>
    %24 = tpu.matmul %22, %23, %cst_13 {dimension_numbers = #tpu.dot_dimension_numbers<[1], [1], [0], [0], [0, 0, 1, 0], [], []>} : vector<16x8xf32>, vector<16x8xf32>, vector<16x16xf32> -> vector<16x16xf32>
    %25 = vector.extract_strided_slice %21 {offsets = [0, 8], sizes = [16, 8], strides = [1, 1]} : vector<16x96xf32> to vector<16x8xf32>
    %26 = vector.extract_strided_slice %21 {offsets = [0, 40], sizes = [16, 8], strides = [1, 1]} : vector<16x96xf32> to vector<16x8xf32>
    %cst_14 = arith.constant dense<0.000000e+00> : vector<16x16xf32>
    %27 = tpu.matmul %25, %26, %cst_14 {dimension_numbers = #tpu.dot_dimension_numbers<[1], [1], [0], [0], [0, 0, 1, 0], [], []>} : vector<16x8xf32>, vector<16x8xf32>, vector<16x16xf32> -> vector<16x16xf32>
    %28 = vector.extract_strided_slice %21 {offsets = [0, 16], sizes = [16, 8], strides = [1, 1]} : vector<16x96xf32> to vector<16x8xf32>
    %29 = vector.extract_strided_slice %21 {offsets = [0, 48], sizes = [16, 8], strides = [1, 1]} : vector<16x96xf32> to vector<16x8xf32>
    %cst_15 = arith.constant dense<0.000000e+00> : vector<16x16xf32>
    %30 = tpu.matmul %28, %29, %cst_15 {dimension_numbers = #tpu.dot_dimension_numbers<[1], [1], [0], [0], [0, 0, 1, 0], [], []>} : vector<16x8xf32>, vector<16x8xf32>, vector<16x16xf32> -> vector<16x16xf32>
    %31 = vector.extract_strided_slice %21 {offsets = [0, 24], sizes = [16, 8], strides = [1, 1]} : vector<16x96xf32> to vector<16x8xf32>
    %32 = vector.extract_strided_slice %21 {offsets = [0, 56], sizes = [16, 8], strides = [1, 1]} : vector<16x96xf32> to vector<16x8xf32>
    %cst_16 = arith.constant dense<0.000000e+00> : vector<16x16xf32>
    %33 = tpu.matmul %31, %32, %cst_16 {dimension_numbers = #tpu.dot_dimension_numbers<[1], [1], [0], [0], [0, 0, 1, 0], [], []>} : vector<16x8xf32>, vector<16x8xf32>, vector<16x16xf32> -> vector<16x16xf32>
    %34 = tpu.concatenate %24, %27, %30, %33 in 0 : vector<16x16xf32>, vector<16x16xf32>, vector<16x16xf32>, vector<16x16xf32> -> vector<64x16xf32>
    %c0_17 = arith.constant 0 : index
    %c0_18 = arith.constant 0 : index
    %35 = vector.load %arg3[%c0_17, %c0_18] : memref<64x16xf32, #tpu.memory_space<vmem>>, vector<64x16xf32>
    %36 = arith.addf %34, %35 : vector<64x16xf32>
    %cst_19 = arith.constant dense<0xFF800000> : vector<64xf32>
    %37 = vector.multi_reduction <maximumf>, %36, %cst_19 [1] : vector<64x16xf32> to vector<64xf32>
    %38 = vector.shape_cast %37 : vector<64xf32> to vector<64x1xf32>
    %39 = vector.broadcast %38 : vector<64x1xf32> to vector<64x16xf32>
    %40 = arith.subf %36, %39 : vector<64x16xf32>
    %41 = math.exp %40 : vector<64x16xf32>
    %cst_20 = arith.constant dense<0.000000e+00> : vector<64xf32>
    %42 = vector.multi_reduction <add>, %41, %cst_20 [1] : vector<64x16xf32> to vector<64xf32>
    %43 = vector.shape_cast %42 : vector<64xf32> to vector<64x1xf32>
    %44 = tpu.reciprocal %43 {approx = true} : vector<64x1xf32> -> vector<64x1xf32>
    %45 = vector.broadcast %44 : vector<64x1xf32> to vector<64x16xf32>
    %46 = arith.mulf %41, %45 : vector<64x16xf32>
    %47 = vector.extract_strided_slice %46 {offsets = [0, 0], sizes = [16, 16], strides = [1, 1]} : vector<64x16xf32> to vector<16x16xf32>
    %48 = vector.extract_strided_slice %21 {offsets = [0, 64], sizes = [16, 8], strides = [1, 1]} : vector<16x96xf32> to vector<16x8xf32>
    %cst_21 = arith.constant dense<0.000000e+00> : vector<16x8xf32>
    %49 = tpu.matmul %47, %48, %cst_21 {dimension_numbers = #tpu.dot_dimension_numbers<[1], [0], [0], [1], [0, 0, 1, 1], [], []>} : vector<16x16xf32>, vector<16x8xf32>, vector<16x8xf32> -> vector<16x8xf32>
    %50 = vector.extract_strided_slice %4 {offsets = [0, 0], sizes = [8, 32], strides = [1, 1]} : vector<32x32xf32> to vector<8x32xf32>
    %cst_22 = arith.constant dense<0.000000e+00> : vector<16x32xf32>
    %51 = tpu.matmul %49, %50, %cst_22 {dimension_numbers = #tpu.dot_dimension_numbers<[1], [0], [0], [1], [0, 0, 1, 1], [], []>} : vector<16x8xf32>, vector<8x32xf32>, vector<16x32xf32> -> vector<16x32xf32>
    %52 = vector.extract_strided_slice %46 {offsets = [16, 0], sizes = [16, 16], strides = [1, 1]} : vector<64x16xf32> to vector<16x16xf32>
    %53 = vector.extract_strided_slice %21 {offsets = [0, 72], sizes = [16, 8], strides = [1, 1]} : vector<16x96xf32> to vector<16x8xf32>
    %cst_23 = arith.constant dense<0.000000e+00> : vector<16x8xf32>
    %54 = tpu.matmul %52, %53, %cst_23 {dimension_numbers = #tpu.dot_dimension_numbers<[1], [0], [0], [1], [0, 0, 1, 1], [], []>} : vector<16x16xf32>, vector<16x8xf32>, vector<16x8xf32> -> vector<16x8xf32>
    %55 = vector.extract_strided_slice %4 {offsets = [8, 0], sizes = [8, 32], strides = [1, 1]} : vector<32x32xf32> to vector<8x32xf32>
    %cst_24 = arith.constant dense<0.000000e+00> : vector<16x32xf32>
    %56 = tpu.matmul %54, %55, %cst_24 {dimension_numbers = #tpu.dot_dimension_numbers<[1], [0], [0], [1], [0, 0, 1, 1], [], []>} : vector<16x8xf32>, vector<8x32xf32>, vector<16x32xf32> -> vector<16x32xf32>
    %57 = arith.addf %51, %56 : vector<16x32xf32>
    %58 = vector.extract_strided_slice %46 {offsets = [32, 0], sizes = [16, 16], strides = [1, 1]} : vector<64x16xf32> to vector<16x16xf32>
    %59 = vector.extract_strided_slice %21 {offsets = [0, 80], sizes = [16, 8], strides = [1, 1]} : vector<16x96xf32> to vector<16x8xf32>
    %cst_25 = arith.constant dense<0.000000e+00> : vector<16x8xf32>
    %60 = tpu.matmul %58, %59, %cst_25 {dimension_numbers = #tpu.dot_dimension_numbers<[1], [0], [0], [1], [0, 0, 1, 1], [], []>} : vector<16x16xf32>, vector<16x8xf32>, vector<16x8xf32> -> vector<16x8xf32>
    %61 = vector.extract_strided_slice %4 {offsets = [16, 0], sizes = [8, 32], strides = [1, 1]} : vector<32x32xf32> to vector<8x32xf32>
    %cst_26 = arith.constant dense<0.000000e+00> : vector<16x32xf32>
    %62 = tpu.matmul %60, %61, %cst_26 {dimension_numbers = #tpu.dot_dimension_numbers<[1], [0], [0], [1], [0, 0, 1, 1], [], []>} : vector<16x8xf32>, vector<8x32xf32>, vector<16x32xf32> -> vector<16x32xf32>
    %63 = arith.addf %57, %62 : vector<16x32xf32>
    %64 = vector.extract_strided_slice %46 {offsets = [48, 0], sizes = [16, 16], strides = [1, 1]} : vector<64x16xf32> to vector<16x16xf32>
    %65 = vector.extract_strided_slice %21 {offsets = [0, 88], sizes = [16, 8], strides = [1, 1]} : vector<16x96xf32> to vector<16x8xf32>
    %cst_27 = arith.constant dense<0.000000e+00> : vector<16x8xf32>
    %66 = tpu.matmul %64, %65, %cst_27 {dimension_numbers = #tpu.dot_dimension_numbers<[1], [0], [0], [1], [0, 0, 1, 1], [], []>} : vector<16x16xf32>, vector<16x8xf32>, vector<16x8xf32> -> vector<16x8xf32>
    %67 = vector.extract_strided_slice %4 {offsets = [24, 0], sizes = [8, 32], strides = [1, 1]} : vector<32x32xf32> to vector<8x32xf32>
    %cst_28 = arith.constant dense<0.000000e+00> : vector<16x32xf32>
    %68 = tpu.matmul %66, %67, %cst_28 {dimension_numbers = #tpu.dot_dimension_numbers<[1], [0], [0], [1], [0, 0, 1, 1], [], []>} : vector<16x8xf32>, vector<8x32xf32>, vector<16x32xf32> -> vector<16x32xf32>
    %69 = arith.addf %63, %68 : vector<16x32xf32>
    %70 = arith.addf %0, %69 : vector<16x32xf32>
    %cst_29 = arith.constant dense<0.000000e+00> : vector<16xf32>
    %71 = vector.multi_reduction <add>, %70, %cst_29 [1] : vector<16x32xf32> to vector<16xf32>
    %72 = vector.shape_cast %71 : vector<16xf32> to vector<16x1xf32>
    %cst_30 = arith.constant 3.200000e+01 : f32
    %73 = vector.broadcast %cst_30 : f32 to vector<16x1xf32>
    %74 = arith.divf %72, %73 : vector<16x1xf32>
    %75 = vector.broadcast %74 : vector<16x1xf32> to vector<16x32xf32>
    %76 = arith.subf %70, %75 : vector<16x32xf32>
    %77 = arith.mulf %76, %76 : vector<16x32xf32>
    %cst_31 = arith.constant dense<0.000000e+00> : vector<16xf32>
    %78 = vector.multi_reduction <add>, %77, %cst_31 [1] : vector<16x32xf32> to vector<16xf32>
    %79 = vector.shape_cast %78 : vector<16xf32> to vector<16x1xf32>
    %cst_32 = arith.constant 3.200000e+01 : f32
    %80 = vector.broadcast %cst_32 : f32 to vector<16x1xf32>
    %81 = arith.divf %79, %80 : vector<16x1xf32>
    %cst_33 = arith.constant 9.99999974E-6 : f32
    %82 = vector.broadcast %cst_33 : f32 to vector<16x1xf32>
    %83 = arith.addf %81, %82 : vector<16x1xf32>
    %84 = math.rsqrt %83 : vector<16x1xf32>
    %85 = vector.broadcast %84 : vector<16x1xf32> to vector<16x32xf32>
    %86 = arith.mulf %76, %85 : vector<16x32xf32>
    %cst_34 = arith.constant dense<0.000000e+00> : vector<16x128xf32>
    %87 = tpu.matmul %86, %1, %cst_34 {dimension_numbers = #tpu.dot_dimension_numbers<[1], [0], [0], [1], [0, 0, 1, 1], [], []>} : vector<16x32xf32>, vector<32x128xf32>, vector<16x128xf32> -> vector<16x128xf32>
    %cst_35 = arith.constant 5.000000e-01 : f32
    %88 = vector.broadcast %cst_35 : f32 to vector<16x128xf32>
    %89 = arith.mulf %88, %87 : vector<16x128xf32>
    %cst_36 = arith.constant 0.707106769 : f32
    %90 = vector.broadcast %cst_36 : f32 to vector<16x128xf32>
    %91 = arith.mulf %87, %90 : vector<16x128xf32>
    %92 = math.erf %91 : vector<16x128xf32>
    %cst_37 = arith.constant 1.000000e+00 : f32
    %93 = vector.broadcast %cst_37 : f32 to vector<16x128xf32>
    %94 = arith.addf %93, %92 : vector<16x128xf32>
    %95 = arith.mulf %89, %94 : vector<16x128xf32>
    %cst_38 = arith.constant dense<0.000000e+00> : vector<16x32xf32>
    %96 = tpu.matmul %95, %3, %cst_38 {dimension_numbers = #tpu.dot_dimension_numbers<[1], [0], [0], [1], [0, 0, 1, 1], [], []>} : vector<16x128xf32>, vector<128x32xf32>, vector<16x32xf32> -> vector<16x32xf32>
    %97 = arith.addf %70, %96 : vector<16x32xf32>
    %c0_39 = arith.constant 0 : index
    %c0_40 = arith.constant 0 : index
    %98 = vector.load %arg4[%c0_39, %c0_40] : memref<16x32xf32, #tpu.memory_space<vmem>>, vector<16x32xf32>
    tpu.vector_store %arg4[%c0_39, %c0_40], %97 {strides = array<i32>} : memref<16x32xf32, #tpu.memory_space<vmem>>, vector<16x32xf32>,
    return
  }
}

</mosaic_0001>

<llo_original>
// kernel: tpu_custom_call.1
$region0: #{tpu_custom_call.1}
  #allocation0 [shape = 'u32[]', space=smem, size = 0x4, offset = 0x4, fixed_abs, tag = 'smem constant byte address 0x4 - core index']
  #allocation1 [shape = 'u32[144,128]{1,0:T(1,128)}', space=vmem, size = 0x12000, scoped, tag = 'internal scratch']
  %s0 = inlined_call_operand.vmem [shape: f32[16,32], index: 0, kind: input, shape index: {}]
  %s1 = inlined_call_operand.vmem [shape: f32[32,224], index: 1, kind: input, shape index: {}]
  %s2 = inlined_call_operand.vmem [shape: f32[160,32], index: 2, kind: input, shape index: {}]
  %s3 = inlined_call_operand.vmem [shape: f32[64,16], index: 3, kind: input, shape index: {}]
  %s4 = inlined_call_operand.hbm [shape: f32[16,32], index: 4, kind: output, shape index: {}]
  %s5 = sld [smem:[#allocation0]]
  $region26: #{tpu_custom_call.1} parent=0
    _
  %s7 = ssub.s32 1, %s5
  %s8 = scalar_select 0, %s7, %s5
  $region1: #{tpu_custom_call.1} parent=0
    #allocation2 [shape = 'u8[8192]{0}', space=vmem, size = 0x2000, scoped, tag = 'output window, operand 0, single buffered']
    #allocation3 [shape = 's32[1]{0}', space=sflag, size = 0x4, scoped, tag = 'scoped memory for tpu_custom_call.1']
    %9 = vsyncpa [#allocation3], 0
    // Predicated region
    $region2: #{tpu_custom_call.1} parent=1 // pred_check
      _
    $region3: #{tpu_custom_call.1} parent=1 // pred_check_branch
      %11 = sbr.rel (0) target = $region5
    $region4: #{tpu_custom_call.1} parent=1 // pred_region
      _
    $region5: #{tpu_custom_call.1} parent=1 // pred_fallthru
      _
    // Predicated region
    $region6: #{tpu_custom_call.1} parent=1 // pred_check
      _
    $region7: #{tpu_custom_call.1} parent=1 // pred_check_branch
      %13 = sbr.rel (0) target = $region9
    $region8: #{tpu_custom_call.1} parent=1 // pred_region
      _
    $region9: #{tpu_custom_call.1} parent=1 // pred_fallthru
      _
    // Predicated region
    $region10: #{tpu_custom_call.1} parent=1 // pred_check
      _
    $region11: #{tpu_custom_call.1} parent=1 // pred_check_branch
      %15 = sbr.rel (0) target = $region13
    $region12: #{tpu_custom_call.1} parent=1 // pred_region
      _
    $region13: #{tpu_custom_call.1} parent=1 // pred_fallthru
      _
    // Predicated region
    $region14: #{tpu_custom_call.1} parent=1 // pred_check
      _
    $region15: #{tpu_custom_call.1} parent=1 // pred_check_branch
      %17 = sbr.rel (0) target = $region17
    $region16: #{tpu_custom_call.1} parent=1 // pred_region
      _
    $region17: #{tpu_custom_call.1} parent=1 // pred_fallthru
      _
    %v18 = vld [vmem:[%s0] sm:$0xff]
    %v19 = vld [vmem:[%s0 + $0x8] sm:$0xff]
    %v20 = vld [vmem:[%s1] sm:$0xff]
    %v21 = vld [vmem:[%s1 + $0x10] sm:$0xff]
    %v22 = vld [vmem:[%s1 + $0x20] sm:$0xff]
    %v23 = vld [vmem:[%s1 + $0x30] sm:$0xff]
    %v24 = vld [vmem:[%s1 + $0x8] sm:$0xff]
    %v25 = vld [vmem:[%s1 + $0x18] sm:$0xff]
    %v26 = vld [vmem:[%s1 + $0x28] sm:$0xff]
    %v27 = vld [vmem:[%s1 + $0x38] sm:$0xff]
    %v28 = vld [vmem:[%s2] sm:$0xff]
    %v29 = vld [vmem:[%s2 + $0x8] sm:$0xff]
    %v30 = vld [vmem:[%s2 + $0x10] sm:$0xff]
    %v31 = vld [vmem:[%s2 + $0x18] sm:$0xff]
    %v32 = vld [vmem:[%s2 + $0x20] sm:$0xff]
    %v33 = vld [vmem:[%s2 + $0x28] sm:$0xff]
    %v34 = vld [vmem:[%s2 + $0x30] sm:$0xff]
    %v35 = vld [vmem:[%s2 + $0x38] sm:$0xff]
    %v36 = vld [vmem:[%s2 + $0x40] sm:$0xff]
    %v37 = vld [vmem:[%s2 + $0x48] sm:$0xff]
    %v38 = vld [vmem:[%s2 + $0x50] sm:$0xff]
    %v39 = vld [vmem:[%s2 + $0x58] sm:$0xff]
    %v40 = vld [vmem:[%s2 + $0x60] sm:$0xff]
    %v41 = vld [vmem:[%s2 + $0x68] sm:$0xff]
    %v42 = vld [vmem:[%s2 + $0x70] sm:$0xff]
    %v43 = vld [vmem:[%s2 + $0x78] sm:$0xff]
    %v44 = vld [vmem:[%s2 + $0x80] sm:$0xff]
    %v45 = vld [vmem:[%s2 + $0x88] sm:$0xff]
    %v46 = vld [vmem:[%s2 + $0x90] sm:$0xff]
    %v47 = vld [vmem:[%s2 + $0x98] sm:$0xff]
    %vm48 = vcmask 261120
    %v49 = vsel %vm48, %v18, 0.0
    %50 = vadd.xlane.f32.xlu0 %v49
    %v51 = vpop.xlane.xlu0 %50
    %v52 = vsel %vm48, %v19, 0.0
    %53 = vadd.xlane.f32.xlu0 %v52
    %v54 = vpop.xlane.xlu0 %53
    %v55 = vrcp.pop 32.0
    %v56 = vmul.f32 %v51, %v55
    %v57 = vmul.f32 %v54, %v55
    %v58 = vsub.f32 %v18, %v56
    %v59 = vsub.f32 %v19, %v57
    %v60 = vmul.f32 %v58, %v58
    %v61 = vmul.f32 %v59, %v59
    %v62 = vsel %vm48, %v60, 0.0
    %63 = vadd.xlane.f32.xlu0 %v62
    %v64 = vpop.xlane.xlu0 %63
    %v65 = vsel %vm48, %v61, 0.0
    %66 = vadd.xlane.f32.xlu0 %v65
    %v67 = vpop.xlane.xlu0 %66
    %v68 = vmul.f32 %v64, %v55
    %v69 = vmul.f32 %v67, %v55
    %v70 = vadd.f32 %v68, 1e-05
    %v71 = vadd.f32 %v69, 1e-05
    %v72 = vrsqrt.pop %v70
    %v73 = vrsqrt.pop %v71
    %v74 = vmul.f32 %v58, %v72
    %v75 = vmul.f32 %v59, %v73
    %v77 = vsel %vm48, %v74, 0
    %v80 = vsel %vm48, %v75, 0
    %82 = vmatprep.subr.mxu0 0.0
    %83 = vmatpush1.msra.mxu0 0.0
    %84 = vmatprep.subr.mxu0 0.0
    %85 = vmatpush1.msra.mxu0 0.0
    %86 = vmatprep.subr.mxu0 0.0
    %87 = vmatpush1.msra.mxu0 0.0
    %88 = vmatprep.subr.mxu0 0.0
    %89 = vmatpush1.msra.mxu0 0.0
    %90 = vmatprep.subr.mxu0 0.0
    %91 = vmatpush1.msra.mxu0 0.0
    %92 = vmatprep.subr.mxu0 0.0
    %93 = vmatpush1.msra.mxu0 0.0
    %94 = vmatprep.subr.mxu0 0.0
    %95 = vmatpush1.msra.mxu0 0.0
    %96 = vmatprep.subr.mxu0 0.0
    %97 = vmatpush1.msra.mxu0 0.0
    %98 = vmatprep.subr.mxu0 0.0
    %99 = vmatpush1.msra.mxu0 0.0
    %100 = vmatprep.subr.mxu0 0.0
    %101 = vmatpush1.msra.mxu0 0.0
    %102 = vmatprep.subr.mxu0 0.0
    %103 = vmatpush1.msra.mxu0 0.0
    %104 = vmatprep.subr.mxu0 0.0
    %105 = vmatpush1.msra.mxu0 0.0
    %106 = vmatprep.subr.mxu0 0.0
    %107 = vmatpush1.msra.mxu0 %v27
    %108 = vmatprep.subr.mxu0 0.0
    %109 = vmatpush1.msra.mxu0 %v26
    %110 = vmatprep.subr.mxu0 0.0
    %111 = vmatpush1.msra.mxu0 %v25
    %112 = vmatprep.subr.mxu0 0.0
    %113 = vmatpush1.msra.mxu0 %v24
    %114 = vmatprep.subr.mxu0 0.0
    %115 = vmatpush2.msra.mxu0 0.0
    %116 = vmatprep.subr.mxu0 0.0
    %117 = vmatpush2.msra.mxu0 0.0
    %118 = vmatprep.subr.mxu0 0.0
    %119 = vmatpush2.msra.mxu0 0.0
    %120 = vmatprep.subr.mxu0 0.0
    %121 = vmatpush2.msra.mxu0 0.0
    %122 = vmatprep.subr.mxu0 0.0
    %123 = vmatpush2.msra.mxu0 0.0
    %124 = vmatprep.subr.mxu0 0.0
    %125 = vmatpush2.msra.mxu0 0.0
    %126 = vmatprep.subr.mxu0 0.0
    %127 = vmatpush2.msra.mxu0 0.0
    %128 = vmatprep.subr.mxu0 0.0
    %129 = vmatpush2.msra.mxu0 0.0
    %130 = vmatprep.subr.mxu0 0.0
    %131 = vmatpush2.msra.mxu0 0.0
    %132 = vmatprep.subr.mxu0 0.0
    %133 = vmatpush2.msra.mxu0 0.0
    %134 = vmatprep.subr.mxu0 0.0
    %135 = vmatpush2.msra.mxu0 0.0
    %136 = vmatprep.subr.mxu0 0.0
    %137 = vmatpush2.msra.mxu0 0.0
    %138 = vmatprep.subr.mxu0 0.0
    %139 = vmatpush2.msra.mxu0 0.0
    %140 = vmatprep.subr.mxu0 0.0
    %141 = vmatpush2.msra.mxu0 0.0
    %142 = vmatprep.subr.mxu0 0.0
    %143 = vmatpush2.msra.mxu0 0.0
    %144 = vmatprep.subr.mxu0 0.0
    %145 = vmatpush2.msra.mxu0 0.0
    %146 = vmatprep.mubr.f32.mxu0 0.0
    %147 = vmatmul.mubr.f32.gmra.mxu0 %v77
    %v148 = vpop.f32.mrf.mxu0
    %v149 = vadd.f32 0.0, %v148
    %v150 = vpop.f32.mrf.mxu0
    %151 = vmatprep.mubr.f32.mxu0 0.0
    %152 = vmatmul.mubr.f32.gmra.mxu0 %v80
    %v153 = vpop.f32.mrf.mxu0
    %v154 = vadd.f32 0.0, %v153
    %v155 = vpop.f32.mrf.mxu0
    %156 = vdwg.mxu0
    %159 = vrot.lane.b32.xlu0 %v149, 96
    %v160 = vpop.permute.xlu0 %159
    %161 = vrot.lane.b32.xlu0 %v154, 96
    %v162 = vpop.permute.xlu0 %161
    %vm163 = vcmask 64512
    %v164 = vsel %vm163, %v149, 0
    %v166 = vsel %vm163, %v154, 0
    %v168 = vsel %vm163, %v160, 0
    %v170 = vsel %vm163, %v162, 0
    %172 = vmatprep.subr.mxu0 0.0
    %173 = vmatpush1.xpose.msra.mxu0 0.0
    %174 = vmatprep.subr.mxu0 0.0
    %175 = vmatpush1.xpose.msra.mxu0 0.0
    %176 = vmatprep.subr.mxu0 0.0
    %177 = vmatpush1.xpose.msra.mxu0 0.0
    %178 = vmatprep.subr.mxu0 0.0
    %179 = vmatpush1.xpose.msra.mxu0 0.0
    %180 = vmatprep.subr.mxu0 0.0
    %181 = vmatpush1.xpose.msra.mxu0 0.0
    %182 = vmatprep.subr.mxu0 0.0
    %183 = vmatpush1.xpose.msra.mxu0 0.0
    %184 = vmatprep.subr.mxu0 0.0
    %185 = vmatpush1.xpose.msra.mxu0 0.0
    %186 = vmatprep.subr.mxu0 0.0
    %187 = vmatpush1.xpose.msra.mxu0 0.0
    %188 = vmatprep.subr.mxu0 0.0
    %189 = vmatpush1.xpose.msra.mxu0 0.0
    %190 = vmatprep.subr.mxu0 0.0
    %191 = vmatpush1.xpose.msra.mxu0 0.0
    %192 = vmatprep.subr.mxu0 0.0
    %193 = vmatpush1.xpose.msra.mxu0 0.0
    %194 = vmatprep.subr.mxu0 0.0
    %195 = vmatpush1.xpose.msra.mxu0 0.0
    %196 = vmatprep.subr.mxu0 0.0
    %197 = vmatpush1.xpose.msra.mxu0 0.0
    %198 = vmatprep.subr.mxu0 0.0
    %199 = vmatpush1.xpose.msra.mxu0 0.0
    %200 = vmatprep.subr.mxu0 0.0
    %201 = vmatpush1.xpose.msra.mxu0 %v170
    %202 = vmatprep.subr.mxu0 0.0
    %203 = vmatpush1.xpose.msra.mxu0 %v168
    %204 = vmatprep.subr.mxu0 0.0
    %205 = vmatpush2.xpose.msra.mxu0 0.0
    %206 = vmatprep.subr.mxu0 0.0
    %207 = vmatpush2.xpose.msra.mxu0 0.0
    %208 = vmatprep.subr.mxu0 0.0
    %209 = vmatpush2.xpose.msra.mxu0 0.0
    %210 = vmatprep.subr.mxu0 0.0
    %211 = vmatpush2.xpose.msra.mxu0 0.0
    %212 = vmatprep.subr.mxu0 0.0
    %213 = vmatpush2.xpose.msra.mxu0 0.0
    %214 = vmatprep.subr.mxu0 0.0
    %215 = vmatpush2.xpose.msra.mxu0 0.0
    %216 = vmatprep.subr.mxu0 0.0
    %217 = vmatpush2.xpose.msra.mxu0 0.0
    %218 = vmatprep.subr.mxu0 0.0
    %219 = vmatpush2.xpose.msra.mxu0 0.0
    %220 = vmatprep.subr.mxu0 0.0
    %221 = vmatpush2.xpose.msra.mxu0 0.0
    %222 = vmatprep.subr.mxu0 0.0
    %223 = vmatpush2.xpose.msra.mxu0 0.0
    %224 = vmatprep.subr.mxu0 0.0
    %225 = vmatpush2.xpose.msra.mxu0 0.0
    %226 = vmatprep.subr.mxu0 0.0
    %227 = vmatpush2.xpose.msra.mxu0 0.0
    %228 = vmatprep.subr.mxu0 0.0
    %229 = vmatpush2.xpose.msra.mxu0 0.0
    %230 = vmatprep.subr.mxu0 0.0
    %231 = vmatpush2.xpose.msra.mxu0 0.0
    %232 = vmatprep.subr.mxu0 0.0
    %233 = vmatpush2.xpose.msra.mxu0 0.0
    %234 = vmatprep.subr.mxu0 0.0
    %235 = vmatpush2.xpose.msra.mxu0 0.0
    %236 = vmatprep.mubr.f32.mxu0 0.0
    %237 = vmatmul.mubr.f32.gmra.mxu0 %v164
    %v238 = vpop.f32.mrf.mxu0
    %v239 = vadd.f32 0.0, %v238
    %v240 = vpop.f32.mrf.mxu0
    %241 = vmatprep.mubr.f32.mxu0 0.0
    %242 = vmatmul.mubr.f32.gmra.mxu0 %v166
    %v243 = vpop.f32.mrf.mxu0
    %v244 = vadd.f32 0.0, %v243
    %v245 = vpop.f32.mrf.mxu0
    %246 = vdwg.mxu0
    %247 = vrot.lane.b32.xlu0 %v149, 120
    %v248 = vpop.permute.xlu0 %247
    %249 = vrot.lane.b32.xlu0 %v154, 120
    %v250 = vpop.permute.xlu0 %249
    %251 = vrot.lane.b32.xlu0 %v149, 88
    %v252 = vpop.permute.xlu0 %251
    %253 = vrot.lane.b32.xlu0 %v154, 88
    %v254 = vpop.permute.xlu0 %253
    %v255 = vsel %vm163, %v248, 0
    %v257 = vsel %vm163, %v250, 0
    %v259 = vsel %vm163, %v252, 0
    %v261 = vsel %vm163, %v254, 0
    %263 = vmatprep.subr.mxu0 0.0
    %264 = vmatpush1.xpose.msra.mxu0 0.0
    %265 = vmatprep.subr.mxu0 0.0
    %266 = vmatpush1.xpose.msra.mxu0 0.0
    %267 = vmatprep.subr.mxu0 0.0
    %268 = vmatpush1.xpose.msra.mxu0 0.0
    %269 = vmatprep.subr.mxu0 0.0
    %270 = vmatpush1.xpose.msra.mxu0 0.0
    %271 = vmatprep.subr.mxu0 0.0
    %272 = vmatpush1.xpose.msra.mxu0 0.0
    %273 = vmatprep.subr.mxu0 0.0
    %274 = vmatpush1.xpose.msra.mxu0 0.0
    %275 = vmatprep.subr.mxu0 0.0
    %276 = vmatpush1.xpose.msra.mxu0 0.0
    %277 = vmatprep.subr.mxu0 0.0
    %278 = vmatpush1.xpose.msra.mxu0 0.0
    %279 = vmatprep.subr.mxu0 0.0
    %280 = vmatpush1.xpose.msra.mxu0 0.0
    %281 = vmatprep.subr.mxu0 0.0
    %282 = vmatpush1.xpose.msra.mxu0 0.0
    %283 = vmatprep.subr.mxu0 0.0
    %284 = vmatpush1.xpose.msra.mxu0 0.0
    %285 = vmatprep.subr.mxu0 0.0
    %286 = vmatpush1.xpose.msra.mxu0 0.0
    %287 = vmatprep.subr.mxu0 0.0
    %288 = vmatpush1.xpose.msra.mxu0 0.0
    %289 = vmatprep.subr.mxu0 0.0
    %290 = vmatpush1.xpose.msra.mxu0 0.0
    %291 = vmatprep.subr.mxu0 0.0
    %292 = vmatpush1.xpose.msra.mxu0 %v261
    %293 = vmatprep.subr.mxu0 0.0
    %294 = vmatpush1.xpose.msra.mxu0 %v259
    %295 = vmatprep.subr.mxu0 0.0
    %296 = vmatpush2.xpose.msra.mxu0 0.0
    %297 = vmatprep.subr.mxu0 0.0
    %298 = vmatpush2.xpose.msra.mxu0 0.0
    %299 = vmatprep.subr.mxu0 0.0
    %300 = vmatpush2.xpose.msra.mxu0 0.0
    %301 = vmatprep.subr.mxu0 0.0
    %302 = vmatpush2.xpose.msra.mxu0 0.0
    %303 = vmatprep.subr.mxu0 0.0
    %304 = vmatpush2.xpose.msra.mxu0 0.0
    %305 = vmatprep.subr.mxu0 0.0
    %306 = vmatpush2.xpose.msra.mxu0 0.0
    %307 = vmatprep.subr.mxu0 0.0
    %308 = vmatpush2.xpose.msra.mxu0 0.0
    %309 = vmatprep.subr.mxu0 0.0
    %310 = vmatpush2.xpose.msra.mxu0 0.0
    %311 = vmatprep.subr.mxu0 0.0
    %312 = vmatpush2.xpose.msra.mxu0 0.0
    %313 = vmatprep.subr.mxu0 0.0
    %314 = vmatpush2.xpose.msra.mxu0 0.0
    %315 = vmatprep.subr.mxu0 0.0
    %316 = vmatpush2.xpose.msra.mxu0 0.0
    %317 = vmatprep.subr.mxu0 0.0
    %318 = vmatpush2.xpose.msra.mxu0 0.0
    %319 = vmatprep.subr.mxu0 0.0
    %320 = vmatpush2.xpose.msra.mxu0 0.0
    %321 = vmatprep.subr.mxu0 0.0
    %322 = vmatpush2.xpose.msra.mxu0 0.0
    %323 = vmatprep.subr.mxu0 0.0
    %324 = vmatpush2.xpose.msra.mxu0 0.0
    %325 = vmatprep.subr.mxu0 0.0
    %326 = vmatpush2.xpose.msra.mxu0 0.0
    %327 = vmatprep.mubr.f32.mxu0 0.0
    %328 = vmatmul.mubr.f32.gmra.mxu0 %v255
    %v329 = vpop.f32.mrf.mxu0
    %v330 = vadd.f32 0.0, %v329
    %v331 = vpop.f32.mrf.mxu0
    %332 = vmatprep.mubr.f32.mxu0 0.0
    %333 = vmatmul.mubr.f32.gmra.mxu0 %v257
    %v334 = vpop.f32.mrf.mxu0
    %v335 = vadd.f32 0.0, %v334
    %v336 = vpop.f32.mrf.mxu0
    %337 = vdwg.mxu0
    %338 = vrot.lane.b32.xlu0 %v149, 112
    %v339 = vpop.permute.xlu0 %338
    %340 = vrot.lane.b32.xlu0 %v154, 112
    %v341 = vpop.permute.xlu0 %340
    %342 = vrot.lane.b32.xlu0 %v149, 80
    %v343 = vpop.permute.xlu0 %342
    %344 = vrot.lane.b32.xlu0 %v154, 80
    %v345 = vpop.permute.xlu0 %344
    %v346 = vsel %vm163, %v339, 0
    %v348 = vsel %vm163, %v341, 0
    %v350 = vsel %vm163, %v343, 0
    %v352 = vsel %vm163, %v345, 0
    %354 = vmatprep.subr.mxu0 0.0
    %355 = vmatpush1.xpose.msra.mxu0 0.0
    %356 = vmatprep.subr.mxu0 0.0
    %357 = vmatpush1.xpose.msra.mxu0 0.0
    %358 = vmatprep.subr.mxu0 0.0
    %359 = vmatpush1.xpose.msra.mxu0 0.0
    %360 = vmatprep.subr.mxu0 0.0
    %361 = vmatpush1.xpose.msra.mxu0 0.0
    %362 = vmatprep.subr.mxu0 0.0
    %363 = vmatpush1.xpose.msra.mxu0 0.0
    %364 = vmatprep.subr.mxu0 0.0
    %365 = vmatpush1.xpose.msra.mxu0 0.0
    %366 = vmatprep.subr.mxu0 0.0
    %367 = vmatpush1.xpose.msra.mxu0 0.0
    %368 = vmatprep.subr.mxu0 0.0
    %369 = vmatpush1.xpose.msra.mxu0 0.0
    %370 = vmatprep.subr.mxu0 0.0
    %371 = vmatpush1.xpose.msra.mxu0 0.0
    %372 = vmatprep.subr.mxu0 0.0
    %373 = vmatpush1.xpose.msra.mxu0 0.0
    %374 = vmatprep.subr.mxu0 0.0
    %375 = vmatpush1.xpose.msra.mxu0 0.0
    %376 = vmatprep.subr.mxu0 0.0
    %377 = vmatpush1.xpose.msra.mxu0 0.0
    %378 = vmatprep.subr.mxu0 0.0
    %379 = vmatpush1.xpose.msra.mxu0 0.0
    %380 = vmatprep.subr.mxu0 0.0
    %381 = vmatpush1.xpose.msra.mxu0 0.0
    %382 = vmatprep.subr.mxu0 0.0
    %383 = vmatpush1.xpose.msra.mxu0 %v352
    %384 = vmatprep.subr.mxu0 0.0
    %385 = vmatpush1.xpose.msra.mxu0 %v350
    %386 = vmatprep.subr.mxu0 0.0
    %387 = vmatpush2.xpose.msra.mxu0 0.0
    %388 = vmatprep.subr.mxu0 0.0
    %389 = vmatpush2.xpose.msra.mxu0 0.0
    %390 = vmatprep.subr.mxu0 0.0
    %391 = vmatpush2.xpose.msra.mxu0 0.0
    %392 = vmatprep.subr.mxu0 0.0
    %393 = vmatpush2.xpose.msra.mxu0 0.0
    %394 = vmatprep.subr.mxu0 0.0
    %395 = vmatpush2.xpose.msra.mxu0 0.0
    %396 = vmatprep.subr.mxu0 0.0
    %397 = vmatpush2.xpose.msra.mxu0 0.0
    %398 = vmatprep.subr.mxu0 0.0
    %399 = vmatpush2.xpose.msra.mxu0 0.0
    %400 = vmatprep.subr.mxu0 0.0
    %401 = vmatpush2.xpose.msra.mxu0 0.0
    %402 = vmatprep.subr.mxu0 0.0
    %403 = vmatpush2.xpose.msra.mxu0 0.0
    %404 = vmatprep.subr.mxu0 0.0
    %405 = vmatpush2.xpose.msra.mxu0 0.0
    %406 = vmatprep.subr.mxu0 0.0
    %407 = vmatpush2.xpose.msra.mxu0 0.0
    %408 = vmatprep.subr.mxu0 0.0
    %409 = vmatpush2.xpose.msra.mxu0 0.0
    %410 = vmatprep.subr.mxu0 0.0
    %411 = vmatpush2.xpose.msra.mxu0 0.0
    %412 = vmatprep.subr.mxu0 0.0
    %413 = vmatpush2.xpose.msra.mxu0 0.0
    %414 = vmatprep.subr.mxu0 0.0
    %415 = vmatpush2.xpose.msra.mxu0 0.0
    %416 = vmatprep.subr.mxu0 0.0
    %417 = vmatpush2.xpose.msra.mxu0 0.0
    %418 = vmatprep.mubr.f32.mxu0 0.0
    %419 = vmatmul.mubr.f32.gmra.mxu0 %v346
    %v420 = vpop.f32.mrf.mxu0
    %v421 = vadd.f32 0.0, %v420
    %v422 = vpop.f32.mrf.mxu0
    %423 = vmatprep.mubr.f32.mxu0 0.0
    %424 = vmatmul.mubr.f32.gmra.mxu0 %v348
    %v425 = vpop.f32.mrf.mxu0
    %v426 = vadd.f32 0.0, %v425
    %v427 = vpop.f32.mrf.mxu0
    %428 = vdwg.mxu0
    %429 = vrot.lane.b32.xlu0 %v149, 104
    %v430 = vpop.permute.xlu0 %429
    %431 = vrot.lane.b32.xlu0 %v154, 104
    %v432 = vpop.permute.xlu0 %431
    %433 = vrot.lane.b32.xlu0 %v149, 72
    %v434 = vpop.permute.xlu0 %433
    %435 = vrot.lane.b32.xlu0 %v154, 72
    %v436 = vpop.permute.xlu0 %435
    %v437 = vsel %vm163, %v430, 0
    %v439 = vsel %vm163, %v432, 0
    %v441 = vsel %vm163, %v434, 0
    %v443 = vsel %vm163, %v436, 0
    %445 = vmatprep.subr.mxu0 0.0
    %446 = vmatpush1.xpose.msra.mxu0 0.0
    %447 = vmatprep.subr.mxu0 0.0
    %448 = vmatpush1.xpose.msra.mxu0 0.0
    %449 = vmatprep.subr.mxu0 0.0
    %450 = vmatpush1.xpose.msra.mxu0 0.0
    %451 = vmatprep.subr.mxu0 0.0
    %452 = vmatpush1.xpose.msra.mxu0 0.0
    %453 = vmatprep.subr.mxu0 0.0
    %454 = vmatpush1.xpose.msra.mxu0 0.0
    %455 = vmatprep.subr.mxu0 0.0
    %456 = vmatpush1.xpose.msra.mxu0 0.0
    %457 = vmatprep.subr.mxu0 0.0
    %458 = vmatpush1.xpose.msra.mxu0 0.0
    %459 = vmatprep.subr.mxu0 0.0
    %460 = vmatpush1.xpose.msra.mxu0 0.0
    %461 = vmatprep.subr.mxu0 0.0
    %462 = vmatpush1.xpose.msra.mxu0 0.0
    %463 = vmatprep.subr.mxu0 0.0
    %464 = vmatpush1.xpose.msra.mxu0 0.0
    %465 = vmatprep.subr.mxu0 0.0
    %466 = vmatpush1.xpose.msra.mxu0 0.0
    %467 = vmatprep.subr.mxu0 0.0
    %468 = vmatpush1.xpose.msra.mxu0 0.0
    %469 = vmatprep.subr.mxu0 0.0
    %470 = vmatpush1.xpose.msra.mxu0 0.0
    %471 = vmatprep.subr.mxu0 0.0
    %472 = vmatpush1.xpose.msra.mxu0 0.0
    %473 = vmatprep.subr.mxu0 0.0
    %474 = vmatpush1.xpose.msra.mxu0 %v443
    %475 = vmatprep.subr.mxu0 0.0
    %476 = vmatpush1.xpose.msra.mxu0 %v441
    %477 = vmatprep.subr.mxu0 0.0
    %478 = vmatpush2.xpose.msra.mxu0 0.0
    %479 = vmatprep.subr.mxu0 0.0
    %480 = vmatpush2.xpose.msra.mxu0 0.0
    %481 = vmatprep.subr.mxu0 0.0
    %482 = vmatpush2.xpose.msra.mxu0 0.0
    %483 = vmatprep.subr.mxu0 0.0
    %484 = vmatpush2.xpose.msra.mxu0 0.0
    %485 = vmatprep.subr.mxu0 0.0
    %486 = vmatpush2.xpose.msra.mxu0 0.0
    %487 = vmatprep.subr.mxu0 0.0
    %488 = vmatpush2.xpose.msra.mxu0 0.0
    %489 = vmatprep.subr.mxu0 0.0
    %490 = vmatpush2.xpose.msra.mxu0 0.0
    %491 = vmatprep.subr.mxu0 0.0
    %492 = vmatpush2.xpose.msra.mxu0 0.0
    %493 = vmatprep.subr.mxu0 0.0
    %494 = vmatpush2.xpose.msra.mxu0 0.0
    %495 = vmatprep.subr.mxu0 0.0
    %496 = vmatpush2.xpose.msra.mxu0 0.0
    %497 = vmatprep.subr.mxu0 0.0
    %498 = vmatpush2.xpose.msra.mxu0 0.0
    %499 = vmatprep.subr.mxu0 0.0
    %500 = vmatpush2.xpose.msra.mxu0 0.0
    %501 = vmatprep.subr.mxu0 0.0
    %502 = vmatpush2.xpose.msra.mxu0 0.0
    %503 = vmatprep.subr.mxu0 0.0
    %504 = vmatpush2.xpose.msra.mxu0 0.0
    %505 = vmatprep.subr.mxu0 0.0
    %506 = vmatpush2.xpose.msra.mxu0 0.0
    %507 = vmatprep.subr.mxu0 0.0
    %508 = vmatpush2.xpose.msra.mxu0 0.0
    %509 = vmatprep.mubr.f32.mxu0 0.0
    %510 = vmatmul.mubr.f32.gmra.mxu0 %v437
    %v511 = vpop.f32.mrf.mxu0
    %v512 = vadd.f32 0.0, %v511
    %v513 = vpop.f32.mrf.mxu0
    %514 = vmatprep.mubr.f32.mxu0 0.0
    %515 = vmatmul.mubr.f32.gmra.mxu0 %v439
    %v516 = vpop.f32.mrf.mxu0
    %v517 = vadd.f32 0.0, %v516
    %v518 = vpop.f32.mrf.mxu0
    %519 = vdwg.mxu0
    %v520 = vld [vmem:[%s3] sm:$0xff]
    %v521 = vld [vmem:[%s3 + $0x8] sm:$0xff]
    %v522 = vld [vmem:[%s3 + $0x10] sm:$0xff]
    %v523 = vld [vmem:[%s3 + $0x18] sm:$0xff]
    %v524 = vld [vmem:[%s3 + $0x20] sm:$0xff]
    %v525 = vld [vmem:[%s3 + $0x28] sm:$0xff]
    %v526 = vld [vmem:[%s3 + $0x30] sm:$0xff]
    %v527 = vld [vmem:[%s3 + $0x38] sm:$0xff]
    %v528 = vadd.f32 %v239, %v520
    %v529 = vadd.f32 %v244, %v521
    %v530 = vadd.f32 %v330, %v522
    %v531 = vadd.f32 %v335, %v523
    %v532 = vadd.f32 %v421, %v524
    %v533 = vadd.f32 %v426, %v525
    %v534 = vadd.f32 %v512, %v526
    %v535 = vadd.f32 %v517, %v527
    %vm536 = vcmask 130048
    %v537 = vsel %vm536, %v528, -inf
    %538 = vmax.xlane.f32.xlu0 %v537
    %v539 = vpop.xlane.xlu0 %538
    %v540 = vsel %vm536, %v529, -inf
    %541 = vmax.xlane.f32.xlu0 %v540
    %v542 = vpop.xlane.xlu0 %541
    %v543 = vsel %vm536, %v530, -inf
    %544 = vmax.xlane.f32.xlu0 %v543
    %v545 = vpop.xlane.xlu0 %544
    %v546 = vsel %vm536, %v531, -inf
    %547 = vmax.xlane.f32.xlu0 %v546
    %v548 = vpop.xlane.xlu0 %547
    %v549 = vsel %vm536, %v532, -inf
    %550 = vmax.xlane.f32.xlu0 %v549
    %v551 = vpop.xlane.xlu0 %550
    %v552 = vsel %vm536, %v533, -inf
    %553 = vmax.xlane.f32.xlu0 %v552
    %v554 = vpop.xlane.xlu0 %553
    %v555 = vsel %vm536, %v534, -inf
    %556 = vmax.xlane.f32.xlu0 %v555
    %v557 = vpop.xlane.xlu0 %556
    %v558 = vsel %vm536, %v535, -inf
    %559 = vmax.xlane.f32.xlu0 %v558
    %v560 = vpop.xlane.xlu0 %559
    %v561 = vsub.f32 %v528, %v539
    %v562 = vsub.f32 %v529, %v542
    %v563 = vsub.f32 %v530, %v545
    %v564 = vsub.f32 %v531, %v548
    %v565 = vsub.f32 %v532, %v551
    %v566 = vsub.f32 %v533, %v554
    %v567 = vsub.f32 %v534, %v557
    %v568 = vsub.f32 %v535, %v560
    %v569 = vmul.f32 %v561, 1.442695
    %v570 = vpow.pop %v569
    %v571 = vmul.f32 %v562, 1.442695
    %v572 = vpow.pop %v571
    %v573 = vmul.f32 %v563, 1.442695
    %v574 = vpow.pop %v573
    %v575 = vmul.f32 %v564, 1.442695
    %v576 = vpow.pop %v575
    %v577 = vmul.f32 %v565, 1.442695
    %v578 = vpow.pop %v577
    %v579 = vmul.f32 %v566, 1.442695
    %v580 = vpow.pop %v579
    %v581 = vmul.f32 %v567, 1.442695
    %v582 = vpow.pop %v581
    %v583 = vmul.f32 %v568, 1.442695
    %v584 = vpow.pop %v583
    %v585 = vsel %vm536, %v570, 0.0
    %586 = vadd.xlane.f32.xlu0 %v585
    %v587 = vpop.xlane.xlu0 %586
    %v588 = vsel %vm536, %v572, 0.0
    %589 = vadd.xlane.f32.xlu0 %v588
    %v590 = vpop.xlane.xlu0 %589
    %v591 = vsel %vm536, %v574, 0.0
    %592 = vadd.xlane.f32.xlu0 %v591
    %v593 = vpop.xlane.xlu0 %592
    %v594 = vsel %vm536, %v576, 0.0
    %595 = vadd.xlane.f32.xlu0 %v594
    %v596 = vpop.xlane.xlu0 %595
    %v597 = vsel %vm536, %v578, 0.0
    %598 = vadd.xlane.f32.xlu0 %v597
    %v599 = vpop.xlane.xlu0 %598
    %v600 = vsel %vm536, %v580, 0.0
    %601 = vadd.xlane.f32.xlu0 %v600
    %v602 = vpop.xlane.xlu0 %601
    %v603 = vsel %vm536, %v582, 0.0
    %604 = vadd.xlane.f32.xlu0 %v603
    %v605 = vpop.xlane.xlu0 %604
    %v606 = vsel %vm536, %v584, 0.0
    %607 = vadd.xlane.f32.xlu0 %v606
    %v608 = vpop.xlane.xlu0 %607
    %v609 = vrcp.pop %v587
    %v610 = vrcp.pop %v590
    %v611 = vrcp.pop %v593
    %v612 = vrcp.pop %v596
    %v613 = vrcp.pop %v599
    %v614 = vrcp.pop %v602
    %v615 = vrcp.pop %v605
    %v616 = vrcp.pop %v608
    %v617 = vmul.f32 %v570, %v609
    %v618 = vmul.f32 %v572, %v610
    %v619 = vmul.f32 %v574, %v611
    %v620 = vmul.f32 %v576, %v612
    %v621 = vmul.f32 %v578, %v613
    %v622 = vmul.f32 %v580, %v614
    %v623 = vmul.f32 %v582, %v615
    %v624 = vmul.f32 %v584, %v616
    %625 = vrot.lane.b32.xlu0 %v149, 64
    %v626 = vpop.permute.xlu0 %625
    %627 = vrot.lane.b32.xlu0 %v154, 64
    %v628 = vpop.permute.xlu0 %627
    %v632 = vsel %vm536, %v617, 0
    %v635 = vsel %vm536, %v618, 0
    %637 = vmatprep.subr.mxu0 0.0
    %638 = vmatpush1.msra.mxu0 0.0
    %639 = vmatprep.subr.mxu0 0.0
    %640 = vmatpush1.msra.mxu0 0.0
    %641 = vmatprep.subr.mxu0 0.0
    %642 = vmatpush1.msra.mxu0 0.0
    %643 = vmatprep.subr.mxu0 0.0
    %644 = vmatpush1.msra.mxu0 0.0
    %645 = vmatprep.subr.mxu0 0.0
    %646 = vmatpush1.msra.mxu0 0.0
    %647 = vmatprep.subr.mxu0 0.0
    %648 = vmatpush1.msra.mxu0 0.0
    %649 = vmatprep.subr.mxu0 0.0
    %650 = vmatpush1.msra.mxu0 0.0
    %651 = vmatprep.subr.mxu0 0.0
    %652 = vmatpush1.msra.mxu0 0.0
    %653 = vmatprep.subr.mxu0 0.0
    %654 = vmatpush1.msra.mxu0 0.0
    %655 = vmatprep.subr.mxu0 0.0
    %656 = vmatpush1.msra.mxu0 0.0
    %657 = vmatprep.subr.mxu0 0.0
    %658 = vmatpush1.msra.mxu0 0.0
    %659 = vmatprep.subr.mxu0 0.0
    %660 = vmatpush1.msra.mxu0 0.0
    %661 = vmatprep.subr.mxu0 0.0
    %662 = vmatpush1.msra.mxu0 0.0
    %663 = vmatprep.subr.mxu0 0.0
    %664 = vmatpush1.msra.mxu0 0.0
    %665 = vmatprep.subr.mxu0 0.0
    %666 = vmatpush1.msra.mxu0 %v628
    %667 = vmatprep.subr.mxu0 0.0
    %668 = vmatpush1.msra.mxu0 %v626
    %669 = vmatprep.subr.mxu0 0.0
    %670 = vmatpush2.msra.mxu0 0.0
    %671 = vmatprep.subr.mxu0 0.0
    %672 = vmatpush2.msra.mxu0 0.0
    %673 = vmatprep.subr.mxu0 0.0
    %674 = vmatpush2.msra.mxu0 0.0
    %675 = vmatprep.subr.mxu0 0.0
    %676 = vmatpush2.msra.mxu0 0.0
    %677 = vmatprep.subr.mxu0 0.0
    %678 = vmatpush2.msra.mxu0 0.0
    %679 = vmatprep.subr.mxu0 0.0
    %680 = vmatpush2.msra.mxu0 0.0
    %681 = vmatprep.subr.mxu0 0.0
    %682 = vmatpush2.msra.mxu0 0.0
    %683 = vmatprep.subr.mxu0 0.0
    %684 = vmatpush2.msra.mxu0 0.0
    %685 = vmatprep.subr.mxu0 0.0
    %686 = vmatpush2.msra.mxu0 0.0
    %687 = vmatprep.subr.mxu0 0.0
    %688 = vmatpush2.msra.mxu0 0.0
    %689 = vmatprep.subr.mxu0 0.0
    %690 = vmatpush2.msra.mxu0 0.0
    %691 = vmatprep.subr.mxu0 0.0
    %692 = vmatpush2.msra.mxu0 0.0
    %693 = vmatprep.subr.mxu0 0.0
    %694 = vmatpush2.msra.mxu0 0.0
    %695 = vmatprep.subr.mxu0 0.0
    %696 = vmatpush2.msra.mxu0 0.0
    %697 = vmatprep.subr.mxu0 0.0
    %698 = vmatpush2.msra.mxu0 0.0
    %699 = vmatprep.subr.mxu0 0.0
    %700 = vmatpush2.msra.mxu0 0.0
    %701 = vmatprep.mubr.f32.mxu0 0.0
    %702 = vmatmul.mubr.f32.gmra.mxu0 %v632
    %v703 = vpop.f32.mrf.mxu0
    %v704 = vadd.f32 0.0, %v703
    %v705 = vpop.f32.mrf.mxu0
    %706 = vmatprep.mubr.f32.mxu0 0.0
    %707 = vmatmul.mubr.f32.gmra.mxu0 %v635
    %v708 = vpop.f32.mrf.mxu0
    %v709 = vadd.f32 0.0, %v708
    %v710 = vpop.f32.mrf.mxu0
    %711 = vdwg.mxu0
    %712 = vrot.lane.b32.xlu0 %v149, 56
    %v713 = vpop.permute.xlu0 %712
    %714 = vrot.lane.b32.xlu0 %v154, 56
    %v715 = vpop.permute.xlu0 %714
    %v719 = vsel %vm536, %v619, 0
    %v722 = vsel %vm536, %v620, 0
    %724 = vmatprep.subr.mxu0 0.0
    %725 = vmatpush1.msra.mxu0 0.0
    %726 = vmatprep.subr.mxu0 0.0
    %727 = vmatpush1.msra.mxu0 0.0
    %728 = vmatprep.subr.mxu0 0.0
    %729 = vmatpush1.msra.mxu0 0.0
    %730 = vmatprep.subr.mxu0 0.0
    %731 = vmatpush1.msra.mxu0 0.0
    %732 = vmatprep.subr.mxu0 0.0
    %733 = vmatpush1.msra.mxu0 0.0
    %734 = vmatprep.subr.mxu0 0.0
    %735 = vmatpush1.msra.mxu0 0.0
    %736 = vmatprep.subr.mxu0 0.0
    %737 = vmatpush1.msra.mxu0 0.0
    %738 = vmatprep.subr.mxu0 0.0
    %739 = vmatpush1.msra.mxu0 0.0
    %740 = vmatprep.subr.mxu0 0.0
    %741 = vmatpush1.msra.mxu0 0.0
    %742 = vmatprep.subr.mxu0 0.0
    %743 = vmatpush1.msra.mxu0 0.0
    %744 = vmatprep.subr.mxu0 0.0
    %745 = vmatpush1.msra.mxu0 0.0
    %746 = vmatprep.subr.mxu0 0.0
    %747 = vmatpush1.msra.mxu0 0.0
    %748 = vmatprep.subr.mxu0 0.0
    %749 = vmatpush1.msra.mxu0 0.0
    %750 = vmatprep.subr.mxu0 0.0
    %751 = vmatpush1.msra.mxu0 0.0
    %752 = vmatprep.subr.mxu0 0.0
    %753 = vmatpush1.msra.mxu0 %v715
    %754 = vmatprep.subr.mxu0 0.0
    %755 = vmatpush1.msra.mxu0 %v713
    %756 = vmatprep.subr.mxu0 0.0
    %757 = vmatpush2.msra.mxu0 0.0
    %758 = vmatprep.subr.mxu0 0.0
    %759 = vmatpush2.msra.mxu0 0.0
    %760 = vmatprep.subr.mxu0 0.0
    %761 = vmatpush2.msra.mxu0 0.0
    %762 = vmatprep.subr.mxu0 0.0
    %763 = vmatpush2.msra.mxu0 0.0
    %764 = vmatprep.subr.mxu0 0.0
    %765 = vmatpush2.msra.mxu0 0.0
    %766 = vmatprep.subr.mxu0 0.0
    %767 = vmatpush2.msra.mxu0 0.0
    %768 = vmatprep.subr.mxu0 0.0
    %769 = vmatpush2.msra.mxu0 0.0
    %770 = vmatprep.subr.mxu0 0.0
    %771 = vmatpush2.msra.mxu0 0.0
    %772 = vmatprep.subr.mxu0 0.0
    %773 = vmatpush2.msra.mxu0 0.0
    %774 = vmatprep.subr.mxu0 0.0
    %775 = vmatpush2.msra.mxu0 0.0
    %776 = vmatprep.subr.mxu0 0.0
    %777 = vmatpush2.msra.mxu0 0.0
    %778 = vmatprep.subr.mxu0 0.0
    %779 = vmatpush2.msra.mxu0 0.0
    %780 = vmatprep.subr.mxu0 0.0
    %781 = vmatpush2.msra.mxu0 0.0
    %782 = vmatprep.subr.mxu0 0.0
    %783 = vmatpush2.msra.mxu0 0.0
    %784 = vmatprep.subr.mxu0 0.0
    %785 = vmatpush2.msra.mxu0 0.0
    %786 = vmatprep.subr.mxu0 0.0
    %787 = vmatpush2.msra.mxu0 0.0
    %788 = vmatprep.mubr.f32.mxu0 0.0
    %789 = vmatmul.mubr.f32.gmra.mxu0 %v719
    %v790 = vpop.f32.mrf.mxu0
    %v791 = vadd.f32 0.0, %v790
    %v792 = vpop.f32.mrf.mxu0
    %793 = vmatprep.mubr.f32.mxu0 0.0
    %794 = vmatmul.mubr.f32.gmra.mxu0 %v722
    %v795 = vpop.f32.mrf.mxu0
    %v796 = vadd.f32 0.0, %v795
    %v797 = vpop.f32.mrf.mxu0
    %798 = vdwg.mxu0
    %v800 = vsel %vm163, %v791, 0
    %v803 = vsel %vm163, %v796, 0
    %805 = vmatprep.subr.mxu0 0.0
    %806 = vmatpush1.msra.mxu0 0.0
    %807 = vmatprep.subr.mxu0 0.0
    %808 = vmatpush1.msra.mxu0 0.0
    %809 = vmatprep.subr.mxu0 0.0
    %810 = vmatpush1.msra.mxu0 0.0
    %811 = vmatprep.subr.mxu0 0.0
    %812 = vmatpush1.msra.mxu0 0.0
    %813 = vmatprep.subr.mxu0 0.0
    %814 = vmatpush1.msra.mxu0 0.0
    %815 = vmatprep.subr.mxu0 0.0
    %816 = vmatpush1.msra.mxu0 0.0
    %817 = vmatprep.subr.mxu0 0.0
    %818 = vmatpush1.msra.mxu0 0.0
    %819 = vmatprep.subr.mxu0 0.0
    %820 = vmatpush1.msra.mxu0 0.0
    %821 = vmatprep.subr.mxu0 0.0
    %822 = vmatpush1.msra.mxu0 0.0
    %823 = vmatprep.subr.mxu0 0.0
    %824 = vmatpush1.msra.mxu0 0.0
    %825 = vmatprep.subr.mxu0 0.0
    %826 = vmatpush1.msra.mxu0 0.0
    %827 = vmatprep.subr.mxu0 0.0
    %828 = vmatpush1.msra.mxu0 0.0
    %829 = vmatprep.subr.mxu0 0.0
    %830 = vmatpush1.msra.mxu0 0.0
    %831 = vmatprep.subr.mxu0 0.0
    %832 = vmatpush1.msra.mxu0 0.0
    %833 = vmatprep.subr.mxu0 0.0
    %834 = vmatpush1.msra.mxu0 0.0
    %835 = vmatprep.subr.mxu0 0.0
    %836 = vmatpush1.msra.mxu0 %v45
    %837 = vmatprep.subr.mxu0 0.0
    %838 = vmatpush2.msra.mxu0 0.0
    %839 = vmatprep.subr.mxu0 0.0
    %840 = vmatpush2.msra.mxu0 0.0
    %841 = vmatprep.subr.mxu0 0.0
    %842 = vmatpush2.msra.mxu0 0.0
    %843 = vmatprep.subr.mxu0 0.0
    %844 = vmatpush2.msra.mxu0 0.0
    %845 = vmatprep.subr.mxu0 0.0
    %846 = vmatpush2.msra.mxu0 0.0
    %847 = vmatprep.subr.mxu0 0.0
    %848 = vmatpush2.msra.mxu0 0.0
    %849 = vmatprep.subr.mxu0 0.0
    %850 = vmatpush2.msra.mxu0 0.0
    %851 = vmatprep.subr.mxu0 0.0
    %852 = vmatpush2.msra.mxu0 0.0
    %853 = vmatprep.subr.mxu0 0.0
    %854 = vmatpush2.msra.mxu0 0.0
    %855 = vmatprep.subr.mxu0 0.0
    %856 = vmatpush2.msra.mxu0 0.0
    %857 = vmatprep.subr.mxu0 0.0
    %858 = vmatpush2.msra.mxu0 0.0
    %859 = vmatprep.subr.mxu0 0.0
    %860 = vmatpush2.msra.mxu0 0.0
    %861 = vmatprep.subr.mxu0 0.0
    %862 = vmatpush2.msra.mxu0 0.0
    %863 = vmatprep.subr.mxu0 0.0
    %864 = vmatpush2.msra.mxu0 0.0
    %865 = vmatprep.subr.mxu0 0.0
    %866 = vmatpush2.msra.mxu0 0.0
    %867 = vmatprep.subr.mxu0 0.0
    %868 = vmatpush2.msra.mxu0 0.0
    %869 = vmatprep.mubr.f32.mxu0 0.0
    %870 = vmatmul.mubr.f32.gmra.mxu0 %v800
    %v871 = vpop.f32.mrf.mxu0
    %v872 = vadd.f32 0.0, %v871
    %v873 = vpop.f32.mrf.mxu0
    %874 = vmatprep.mubr.f32.mxu0 0.0
    %875 = vmatmul.mubr.f32.gmra.mxu0 %v803
    %v876 = vpop.f32.mrf.mxu0
    %v877 = vadd.f32 0.0, %v876
    %v878 = vpop.f32.mrf.mxu0
    %879 = vdwg.mxu0
    %v881 = vsel %vm163, %v704, 0
    %v884 = vsel %vm163, %v709, 0
    %886 = vmatprep.subr.mxu0 0.0
    %887 = vmatpush1.msra.mxu0 0.0
    %888 = vmatprep.subr.mxu0 0.0
    %889 = vmatpush1.msra.mxu0 0.0
    %890 = vmatprep.subr.mxu0 0.0
    %891 = vmatpush1.msra.mxu0 0.0
    %892 = vmatprep.subr.mxu0 0.0
    %893 = vmatpush1.msra.mxu0 0.0
    %894 = vmatprep.subr.mxu0 0.0
    %895 = vmatpush1.msra.mxu0 0.0
    %896 = vmatprep.subr.mxu0 0.0
    %897 = vmatpush1.msra.mxu0 0.0
    %898 = vmatprep.subr.mxu0 0.0
    %899 = vmatpush1.msra.mxu0 0.0
    %900 = vmatprep.subr.mxu0 0.0
    %901 = vmatpush1.msra.mxu0 0.0
    %902 = vmatprep.subr.mxu0 0.0
    %903 = vmatpush1.msra.mxu0 0.0
    %904 = vmatprep.subr.mxu0 0.0
    %905 = vmatpush1.msra.mxu0 0.0
    %906 = vmatprep.subr.mxu0 0.0
    %907 = vmatpush1.msra.mxu0 0.0
    %908 = vmatprep.subr.mxu0 0.0
    %909 = vmatpush1.msra.mxu0 0.0
    %910 = vmatprep.subr.mxu0 0.0
    %911 = vmatpush1.msra.mxu0 0.0
    %912 = vmatprep.subr.mxu0 0.0
    %913 = vmatpush1.msra.mxu0 0.0
    %914 = vmatprep.subr.mxu0 0.0
    %915 = vmatpush1.msra.mxu0 0.0
    %916 = vmatprep.subr.mxu0 0.0
    %917 = vmatpush1.msra.mxu0 %v44
    %918 = vmatprep.subr.mxu0 0.0
    %919 = vmatpush2.msra.mxu0 0.0
    %920 = vmatprep.subr.mxu0 0.0
    %921 = vmatpush2.msra.mxu0 0.0
    %922 = vmatprep.subr.mxu0 0.0
    %923 = vmatpush2.msra.mxu0 0.0
    %924 = vmatprep.subr.mxu0 0.0
    %925 = vmatpush2.msra.mxu0 0.0
    %926 = vmatprep.subr.mxu0 0.0
    %927 = vmatpush2.msra.mxu0 0.0
    %928 = vmatprep.subr.mxu0 0.0
    %929 = vmatpush2.msra.mxu0 0.0
    %930 = vmatprep.subr.mxu0 0.0
    %931 = vmatpush2.msra.mxu0 0.0
    %932 = vmatprep.subr.mxu0 0.0
    %933 = vmatpush2.msra.mxu0 0.0
    %934 = vmatprep.subr.mxu0 0.0
    %935 = vmatpush2.msra.mxu0 0.0
    %936 = vmatprep.subr.mxu0 0.0
    %937 = vmatpush2.msra.mxu0 0.0
    %938 = vmatprep.subr.mxu0 0.0
    %939 = vmatpush2.msra.mxu0 0.0
    %940 = vmatprep.subr.mxu0 0.0
    %941 = vmatpush2.msra.mxu0 0.0
    %942 = vmatprep.subr.mxu0 0.0
    %943 = vmatpush2.msra.mxu0 0.0
    %944 = vmatprep.subr.mxu0 0.0
    %945 = vmatpush2.msra.mxu0 0.0
    %946 = vmatprep.subr.mxu0 0.0
    %947 = vmatpush2.msra.mxu0 0.0
    %948 = vmatprep.subr.mxu0 0.0
    %949 = vmatpush2.msra.mxu0 0.0
    %950 = vmatprep.mubr.f32.mxu0 0.0
    %951 = vmatmul.mubr.f32.gmra.mxu0 %v881
    %v952 = vpop.f32.mrf.mxu0
    %v953 = vadd.f32 %v872, %v952
    %v954 = vpop.f32.mrf.mxu0
    %955 = vmatprep.mubr.f32.mxu0 0.0
    %956 = vmatmul.mubr.f32.gmra.mxu0 %v884
    %v957 = vpop.f32.mrf.mxu0
    %v958 = vadd.f32 %v877, %v957
    %v959 = vpop.f32.mrf.mxu0
    %960 = vdwg.mxu0
    %961 = vrot.lane.b32.xlu0 %v149, 48
    %v962 = vpop.permute.xlu0 %961
    %963 = vrot.lane.b32.xlu0 %v154, 48
    %v964 = vpop.permute.xlu0 %963
    %v968 = vsel %vm536, %v621, 0
    %v971 = vsel %vm536, %v622, 0
    %973 = vmatprep.subr.mxu0 0.0
    %974 = vmatpush1.msra.mxu0 0.0
    %975 = vmatprep.subr.mxu0 0.0
    %976 = vmatpush1.msra.mxu0 0.0
    %977 = vmatprep.subr.mxu0 0.0
    %978 = vmatpush1.msra.mxu0 0.0
    %979 = vmatprep.subr.mxu0 0.0
    %980 = vmatpush1.msra.mxu0 0.0
    %981 = vmatprep.subr.mxu0 0.0
    %982 = vmatpush1.msra.mxu0 0.0
    %983 = vmatprep.subr.mxu0 0.0
    %984 = vmatpush1.msra.mxu0 0.0
    %985 = vmatprep.subr.mxu0 0.0
    %986 = vmatpush1.msra.mxu0 0.0
    %987 = vmatprep.subr.mxu0 0.0
    %988 = vmatpush1.msra.mxu0 0.0
    %989 = vmatprep.subr.mxu0 0.0
    %990 = vmatpush1.msra.mxu0 0.0
    %991 = vmatprep.subr.mxu0 0.0
    %992 = vmatpush1.msra.mxu0 0.0
    %993 = vmatprep.subr.mxu0 0.0
    %994 = vmatpush1.msra.mxu0 0.0
    %995 = vmatprep.subr.mxu0 0.0
    %996 = vmatpush1.msra.mxu0 0.0
    %997 = vmatprep.subr.mxu0 0.0
    %998 = vmatpush1.msra.mxu0 0.0
    %999 = vmatprep.subr.mxu0 0.0
    %1000 = vmatpush1.msra.mxu0 0.0
    %1001 = vmatprep.subr.mxu0 0.0
    %1002 = vmatpush1.msra.mxu0 %v964
    %1003 = vmatprep.subr.mxu0 0.0
    %1004 = vmatpush1.msra.mxu0 %v962
    %1005 = vmatprep.subr.mxu0 0.0
    %1006 = vmatpush2.msra.mxu0 0.0
    %1007 = vmatprep.subr.mxu0 0.0
    %1008 = vmatpush2.msra.mxu0 0.0
    %1009 = vmatprep.subr.mxu0 0.0
    %1010 = vmatpush2.msra.mxu0 0.0
    %1011 = vmatprep.subr.mxu0 0.0
    %1012 = vmatpush2.msra.mxu0 0.0
    %1013 = vmatprep.subr.mxu0 0.0
    %1014 = vmatpush2.msra.mxu0 0.0
    %1015 = vmatprep.subr.mxu0 0.0
    %1016 = vmatpush2.msra.mxu0 0.0
    %1017 = vmatprep.subr.mxu0 0.0
    %1018 = vmatpush2.msra.mxu0 0.0
    %1019 = vmatprep.subr.mxu0 0.0
    %1020 = vmatpush2.msra.mxu0 0.0
    %1021 = vmatprep.subr.mxu0 0.0
    %1022 = vmatpush2.msra.mxu0 0.0
    %1023 = vmatprep.subr.mxu0 0.0
    %1024 = vmatpush2.msra.mxu0 0.0
    %1025 = vmatprep.subr.mxu0 0.0
    %1026 = vmatpush2.msra.mxu0 0.0
    %1027 = vmatprep.subr.mxu0 0.0
    %1028 = vmatpush2.msra.mxu0 0.0
    %1029 = vmatprep.subr.mxu0 0.0
    %1030 = vmatpush2.msra.mxu0 0.0
    %1031 = vmatprep.subr.mxu0 0.0
    %1032 = vmatpush2.msra.mxu0 0.0
    %1033 = vmatprep.subr.mxu0 0.0
    %1034 = vmatpush2.msra.mxu0 0.0
    %1035 = vmatprep.subr.mxu0 0.0
    %1036 = vmatpush2.msra.mxu0 0.0
    %1037 = vmatprep.mubr.f32.mxu0 0.0
    %1038 = vmatmul.mubr.f32.gmra.mxu0 %v968
    %v1039 = vpop.f32.mrf.mxu0
    %v1040 = vadd.f32 0.0, %v1039
    %v1041 = vpop.f32.mrf.mxu0
    %1042 = vmatprep.mubr.f32.mxu0 0.0
    %1043 = vmatmul.mubr.f32.gmra.mxu0 %v971
    %v1044 = vpop.f32.mrf.mxu0
    %v1045 = vadd.f32 0.0, %v1044
    %v1046 = vpop.f32.mrf.mxu0
    %1047 = vdwg.mxu0
    %v1049 = vsel %vm163, %v1040, 0
    %v1052 = vsel %vm163, %v1045, 0
    %1054 = vmatprep.subr.mxu0 0.0
    %1055 = vmatpush1.msra.mxu0 0.0
    %1056 = vmatprep.subr.mxu0 0.0
    %1057 = vmatpush1.msra.mxu0 0.0
    %1058 = vmatprep.subr.mxu0 0.0
    %1059 = vmatpush1.msra.mxu0 0.0
    %1060 = vmatprep.subr.mxu0 0.0
    %1061 = vmatpush1.msra.mxu0 0.0
    %1062 = vmatprep.subr.mxu0 0.0
    %1063 = vmatpush1.msra.mxu0 0.0
    %1064 = vmatprep.subr.mxu0 0.0
    %1065 = vmatpush1.msra.mxu0 0.0
    %1066 = vmatprep.subr.mxu0 0.0
    %1067 = vmatpush1.msra.mxu0 0.0
    %1068 = vmatprep.subr.mxu0 0.0
    %1069 = vmatpush1.msra.mxu0 0.0
    %1070 = vmatprep.subr.mxu0 0.0
    %1071 = vmatpush1.msra.mxu0 0.0
    %1072 = vmatprep.subr.mxu0 0.0
    %1073 = vmatpush1.msra.mxu0 0.0
    %1074 = vmatprep.subr.mxu0 0.0
    %1075 = vmatpush1.msra.mxu0 0.0
    %1076 = vmatprep.subr.mxu0 0.0
    %1077 = vmatpush1.msra.mxu0 0.0
    %1078 = vmatprep.subr.mxu0 0.0
    %1079 = vmatpush1.msra.mxu0 0.0
    %1080 = vmatprep.subr.mxu0 0.0
    %1081 = vmatpush1.msra.mxu0 0.0
    %1082 = vmatprep.subr.mxu0 0.0
    %1083 = vmatpush1.msra.mxu0 0.0
    %1084 = vmatprep.subr.mxu0 0.0
    %1085 = vmatpush1.msra.mxu0 %v46
    %1086 = vmatprep.subr.mxu0 0.0
    %1087 = vmatpush2.msra.mxu0 0.0
    %1088 = vmatprep.subr.mxu0 0.0
    %1089 = vmatpush2.msra.mxu0 0.0
    %1090 = vmatprep.subr.mxu0 0.0
    %1091 = vmatpush2.msra.mxu0 0.0
    %1092 = vmatprep.subr.mxu0 0.0
    %1093 = vmatpush2.msra.mxu0 0.0
    %1094 = vmatprep.subr.mxu0 0.0
    %1095 = vmatpush2.msra.mxu0 0.0
    %1096 = vmatprep.subr.mxu0 0.0
    %1097 = vmatpush2.msra.mxu0 0.0
    %1098 = vmatprep.subr.mxu0 0.0
    %1099 = vmatpush2.msra.mxu0 0.0
    %1100 = vmatprep.subr.mxu0 0.0
    %1101 = vmatpush2.msra.mxu0 0.0
    %1102 = vmatprep.subr.mxu0 0.0
    %1103 = vmatpush2.msra.mxu0 0.0
    %1104 = vmatprep.subr.mxu0 0.0
    %1105 = vmatpush2.msra.mxu0 0.0
    %1106 = vmatprep.subr.mxu0 0.0
    %1107 = vmatpush2.msra.mxu0 0.0
    %1108 = vmatprep.subr.mxu0 0.0
    %1109 = vmatpush2.msra.mxu0 0.0
    %1110 = vmatprep.subr.mxu0 0.0
    %1111 = vmatpush2.msra.mxu0 0.0
    %1112 = vmatprep.subr.mxu0 0.0
    %1113 = vmatpush2.msra.mxu0 0.0
    %1114 = vmatprep.subr.mxu0 0.0
    %1115 = vmatpush2.msra.mxu0 0.0
    %1116 = vmatprep.subr.mxu0 0.0
    %1117 = vmatpush2.msra.mxu0 0.0
    %1118 = vmatprep.mubr.f32.mxu0 0.0
    %1119 = vmatmul.mubr.f32.gmra.mxu0 %v1049
    %v1120 = vpop.f32.mrf.mxu0
    %v1121 = vadd.f32 0.0, %v1120
    %v1122 = vpop.f32.mrf.mxu0
    %1123 = vmatprep.mubr.f32.mxu0 0.0
    %1124 = vmatmul.mubr.f32.gmra.mxu0 %v1052
    %v1125 = vpop.f32.mrf.mxu0
    %v1126 = vadd.f32 0.0, %v1125
    %v1127 = vpop.f32.mrf.mxu0
    %1128 = vdwg.mxu0
    %v1129 = vadd.f32 %v953, %v1121
    %v1130 = vadd.f32 %v958, %v1126
    %1131 = vrot.lane.b32.xlu0 %v149, 40
    %v1132 = vpop.permute.xlu0 %1131
    %1133 = vrot.lane.b32.xlu0 %v154, 40
    %v1134 = vpop.permute.xlu0 %1133
    %v1138 = vsel %vm536, %v623, 0
    %v1141 = vsel %vm536, %v624, 0
    %1143 = vmatprep.subr.mxu0 0.0
    %1144 = vmatpush1.msra.mxu0 0.0
    %1145 = vmatprep.subr.mxu0 0.0
    %1146 = vmatpush1.msra.mxu0 0.0
    %1147 = vmatprep.subr.mxu0 0.0
    %1148 = vmatpush1.msra.mxu0 0.0
    %1149 = vmatprep.subr.mxu0 0.0
    %1150 = vmatpush1.msra.mxu0 0.0
    %1151 = vmatprep.subr.mxu0 0.0
    %1152 = vmatpush1.msra.mxu0 0.0
    %1153 = vmatprep.subr.mxu0 0.0
    %1154 = vmatpush1.msra.mxu0 0.0
    %1155 = vmatprep.subr.mxu0 0.0
    %1156 = vmatpush1.msra.mxu0 0.0
    %1157 = vmatprep.subr.mxu0 0.0
    %1158 = vmatpush1.msra.mxu0 0.0
    %1159 = vmatprep.subr.mxu0 0.0
    %1160 = vmatpush1.msra.mxu0 0.0
    %1161 = vmatprep.subr.mxu0 0.0
    %1162 = vmatpush1.msra.mxu0 0.0
    %1163 = vmatprep.subr.mxu0 0.0
    %1164 = vmatpush1.msra.mxu0 0.0
    %1165 = vmatprep.subr.mxu0 0.0
    %1166 = vmatpush1.msra.mxu0 0.0
    %1167 = vmatprep.subr.mxu0 0.0
    %1168 = vmatpush1.msra.mxu0 0.0
    %1169 = vmatprep.subr.mxu0 0.0
    %1170 = vmatpush1.msra.mxu0 0.0
    %1171 = vmatprep.subr.mxu0 0.0
    %1172 = vmatpush1.msra.mxu0 %v1134
    %1173 = vmatprep.subr.mxu0 0.0
    %1174 = vmatpush1.msra.mxu0 %v1132
    %1175 = vmatprep.subr.mxu0 0.0
    %1176 = vmatpush2.msra.mxu0 0.0
    %1177 = vmatprep.subr.mxu0 0.0
    %1178 = vmatpush2.msra.mxu0 0.0
    %1179 = vmatprep.subr.mxu0 0.0
    %1180 = vmatpush2.msra.mxu0 0.0
    %1181 = vmatprep.subr.mxu0 0.0
    %1182 = vmatpush2.msra.mxu0 0.0
    %1183 = vmatprep.subr.mxu0 0.0
    %1184 = vmatpush2.msra.mxu0 0.0
    %1185 = vmatprep.subr.mxu0 0.0
    %1186 = vmatpush2.msra.mxu0 0.0
    %1187 = vmatprep.subr.mxu0 0.0
    %1188 = vmatpush2.msra.mxu0 0.0
    %1189 = vmatprep.subr.mxu0 0.0
    %1190 = vmatpush2.msra.mxu0 0.0
    %1191 = vmatprep.subr.mxu0 0.0
    %1192 = vmatpush2.msra.mxu0 0.0
    %1193 = vmatprep.subr.mxu0 0.0
    %1194 = vmatpush2.msra.mxu0 0.0
    %1195 = vmatprep.subr.mxu0 0.0
    %1196 = vmatpush2.msra.mxu0 0.0
    %1197 = vmatprep.subr.mxu0 0.0
    %1198 = vmatpush2.msra.mxu0 0.0
    %1199 = vmatprep.subr.mxu0 0.0
    %1200 = vmatpush2.msra.mxu0 0.0
    %1201 = vmatprep.subr.mxu0 0.0
    %1202 = vmatpush2.msra.mxu0 0.0
    %1203 = vmatprep.subr.mxu0 0.0
    %1204 = vmatpush2.msra.mxu0 0.0
    %1205 = vmatprep.subr.mxu0 0.0
    %1206 = vmatpush2.msra.mxu0 0.0
    %1207 = vmatprep.mubr.f32.mxu0 0.0
    %1208 = vmatmul.mubr.f32.gmra.mxu0 %v1138
    %v1209 = vpop.f32.mrf.mxu0
    %v1210 = vadd.f32 0.0, %v1209
    %v1211 = vpop.f32.mrf.mxu0
    %1212 = vmatprep.mubr.f32.mxu0 0.0
    %1213 = vmatmul.mubr.f32.gmra.mxu0 %v1141
    %v1214 = vpop.f32.mrf.mxu0
    %v1215 = vadd.f32 0.0, %v1214
    %v1216 = vpop.f32.mrf.mxu0
    %1217 = vdwg.mxu0
    %v1219 = vsel %vm163, %v1210, 0
    %v1222 = vsel %vm163, %v1215, 0
    %1224 = vmatprep.subr.mxu0 0.0
    %1225 = vmatpush1.msra.mxu0 0.0
    %1226 = vmatprep.subr.mxu0 0.0
    %1227 = vmatpush1.msra.mxu0 0.0
    %1228 = vmatprep.subr.mxu0 0.0
    %1229 = vmatpush1.msra.mxu0 0.0
    %1230 = vmatprep.subr.mxu0 0.0
    %1231 = vmatpush1.msra.mxu0 0.0
    %1232 = vmatprep.subr.mxu0 0.0
    %1233 = vmatpush1.msra.mxu0 0.0
    %1234 = vmatprep.subr.mxu0 0.0
    %1235 = vmatpush1.msra.mxu0 0.0
    %1236 = vmatprep.subr.mxu0 0.0
    %1237 = vmatpush1.msra.mxu0 0.0
    %1238 = vmatprep.subr.mxu0 0.0
    %1239 = vmatpush1.msra.mxu0 0.0
    %1240 = vmatprep.subr.mxu0 0.0
    %1241 = vmatpush1.msra.mxu0 0.0
    %1242 = vmatprep.subr.mxu0 0.0
    %1243 = vmatpush1.msra.mxu0 0.0
    %1244 = vmatprep.subr.mxu0 0.0
    %1245 = vmatpush1.msra.mxu0 0.0
    %1246 = vmatprep.subr.mxu0 0.0
    %1247 = vmatpush1.msra.mxu0 0.0
    %1248 = vmatprep.subr.mxu0 0.0
    %1249 = vmatpush1.msra.mxu0 0.0
    %1250 = vmatprep.subr.mxu0 0.0
    %1251 = vmatpush1.msra.mxu0 0.0
    %1252 = vmatprep.subr.mxu0 0.0
    %1253 = vmatpush1.msra.mxu0 0.0
    %1254 = vmatprep.subr.mxu0 0.0
    %1255 = vmatpush1.msra.mxu0 %v47
    %1256 = vmatprep.subr.mxu0 0.0
    %1257 = vmatpush2.msra.mxu0 0.0
    %1258 = vmatprep.subr.mxu0 0.0
    %1259 = vmatpush2.msra.mxu0 0.0
    %1260 = vmatprep.subr.mxu0 0.0
    %1261 = vmatpush2.msra.mxu0 0.0
    %1262 = vmatprep.subr.mxu0 0.0
    %1263 = vmatpush2.msra.mxu0 0.0
    %1264 = vmatprep.subr.mxu0 0.0
    %1265 = vmatpush2.msra.mxu0 0.0
    %1266 = vmatprep.subr.mxu0 0.0
    %1267 = vmatpush2.msra.mxu0 0.0
    %1268 = vmatprep.subr.mxu0 0.0
    %1269 = vmatpush2.msra.mxu0 0.0
    %1270 = vmatprep.subr.mxu0 0.0
    %1271 = vmatpush2.msra.mxu0 0.0
    %1272 = vmatprep.subr.mxu0 0.0
    %1273 = vmatpush2.msra.mxu0 0.0
    %1274 = vmatprep.subr.mxu0 0.0
    %1275 = vmatpush2.msra.mxu0 0.0
    %1276 = vmatprep.subr.mxu0 0.0
    %1277 = vmatpush2.msra.mxu0 0.0
    %1278 = vmatprep.subr.mxu0 0.0
    %1279 = vmatpush2.msra.mxu0 0.0
    %1280 = vmatprep.subr.mxu0 0.0
    %1281 = vmatpush2.msra.mxu0 0.0
    %1282 = vmatprep.subr.mxu0 0.0
    %1283 = vmatpush2.msra.mxu0 0.0
    %1284 = vmatprep.subr.mxu0 0.0
    %1285 = vmatpush2.msra.mxu0 0.0
    %1286 = vmatprep.subr.mxu0 0.0
    %1287 = vmatpush2.msra.mxu0 0.0
    %1288 = vmatprep.mubr.f32.mxu0 0.0
    %1289 = vmatmul.mubr.f32.gmra.mxu0 %v1219
    %v1290 = vpop.f32.mrf.mxu0
    %v1291 = vadd.f32 0.0, %v1290
    %v1292 = vpop.f32.mrf.mxu0
    %1293 = vmatprep.mubr.f32.mxu0 0.0
    %1294 = vmatmul.mubr.f32.gmra.mxu0 %v1222
    %v1295 = vpop.f32.mrf.mxu0
    %v1296 = vadd.f32 0.0, %v1295
    %v1297 = vpop.f32.mrf.mxu0
    %1298 = vdwg.mxu0
    %v1299 = vadd.f32 %v1129, %v1291
    %v1300 = vadd.f32 %v1130, %v1296
    %v1301 = vadd.f32 %v18, %v1299
    %v1302 = vadd.f32 %v19, %v1300
    %v1303 = vsel %vm48, %v1301, 0.0
    %1304 = vadd.xlane.f32.xlu0 %v1303
    %v1305 = vpop.xlane.xlu0 %1304
    %v1306 = vsel %vm48, %v1302, 0.0
    %1307 = vadd.xlane.f32.xlu0 %v1306
    %v1308 = vpop.xlane.xlu0 %1307
    %v1309 = vmul.f32 %v1305, %v55
    %v1310 = vmul.f32 %v1308, %v55
    %v1311 = vsub.f32 %v1301, %v1309
    %v1312 = vsub.f32 %v1302, %v1310
    %v1313 = vmul.f32 %v1311, %v1311
    %v1314 = vmul.f32 %v1312, %v1312
    %v1315 = vsel %vm48, %v1313, 0.0
    %1316 = vadd.xlane.f32.xlu0 %v1315
    %v1317 = vpop.xlane.xlu0 %1316
    %v1318 = vsel %vm48, %v1314, 0.0
    %1319 = vadd.xlane.f32.xlu0 %v1318
    %v1320 = vpop.xlane.xlu0 %1319
    %v1321 = vmul.f32 %v1317, %v55
    %v1322 = vmul.f32 %v1320, %v55
    %v1323 = vadd.f32 %v1321, 1e-05
    %v1324 = vadd.f32 %v1322, 1e-05
    %v1325 = vrsqrt.pop %v1323
    %v1326 = vrsqrt.pop %v1324
    %v1327 = vmul.f32 %v1311, %v1325
    %v1328 = vmul.f32 %v1312, %v1326
    %v1330 = vsel %vm48, %v1327, 0
    %v1333 = vsel %vm48, %v1328, 0
    %1335 = vmatprep.subr.mxu0 0.0
    %1336 = vmatpush1.msra.mxu0 0.0
    %1337 = vmatprep.subr.mxu0 0.0
    %1338 = vmatpush1.msra.mxu0 0.0
    %1339 = vmatprep.subr.mxu0 0.0
    %1340 = vmatpush1.msra.mxu0 0.0
    %1341 = vmatprep.subr.mxu0 0.0
    %1342 = vmatpush1.msra.mxu0 0.0
    %1343 = vmatprep.subr.mxu0 0.0
    %1344 = vmatpush1.msra.mxu0 0.0
    %1345 = vmatprep.subr.mxu0 0.0
    %1346 = vmatpush1.msra.mxu0 0.0
    %1347 = vmatprep.subr.mxu0 0.0
    %1348 = vmatpush1.msra.mxu0 0.0
    %1349 = vmatprep.subr.mxu0 0.0
    %1350 = vmatpush1.msra.mxu0 0.0
    %1351 = vmatprep.subr.mxu0 0.0
    %1352 = vmatpush1.msra.mxu0 0.0
    %1353 = vmatprep.subr.mxu0 0.0
    %1354 = vmatpush1.msra.mxu0 0.0
    %1355 = vmatprep.subr.mxu0 0.0
    %1356 = vmatpush1.msra.mxu0 0.0
    %1357 = vmatprep.subr.mxu0 0.0
    %1358 = vmatpush1.msra.mxu0 0.0
    %1359 = vmatprep.subr.mxu0 0.0
    %1360 = vmatpush1.msra.mxu0 %v23
    %1361 = vmatprep.subr.mxu0 0.0
    %1362 = vmatpush1.msra.mxu0 %v22
    %1363 = vmatprep.subr.mxu0 0.0
    %1364 = vmatpush1.msra.mxu0 %v21
    %1365 = vmatprep.subr.mxu0 0.0
    %1366 = vmatpush1.msra.mxu0 %v20
    %1367 = vmatprep.subr.mxu0 0.0
    %1368 = vmatpush2.msra.mxu0 0.0
    %1369 = vmatprep.subr.mxu0 0.0
    %1370 = vmatpush2.msra.mxu0 0.0
    %1371 = vmatprep.subr.mxu0 0.0
    %1372 = vmatpush2.msra.mxu0 0.0
    %1373 = vmatprep.subr.mxu0 0.0
    %1374 = vmatpush2.msra.mxu0 0.0
    %1375 = vmatprep.subr.mxu0 0.0
    %1376 = vmatpush2.msra.mxu0 0.0
    %1377 = vmatprep.subr.mxu0 0.0
    %1378 = vmatpush2.msra.mxu0 0.0
    %1379 = vmatprep.subr.mxu0 0.0
    %1380 = vmatpush2.msra.mxu0 0.0
    %1381 = vmatprep.subr.mxu0 0.0
    %1382 = vmatpush2.msra.mxu0 0.0
    %1383 = vmatprep.subr.mxu0 0.0
    %1384 = vmatpush2.msra.mxu0 0.0
    %1385 = vmatprep.subr.mxu0 0.0
    %1386 = vmatpush2.msra.mxu0 0.0
    %1387 = vmatprep.subr.mxu0 0.0
    %1388 = vmatpush2.msra.mxu0 0.0
    %1389 = vmatprep.subr.mxu0 0.0
    %1390 = vmatpush2.msra.mxu0 0.0
    %1391 = vmatprep.subr.mxu0 0.0
    %1392 = vmatpush2.msra.mxu0 0.0
    %1393 = vmatprep.subr.mxu0 0.0
    %1394 = vmatpush2.msra.mxu0 0.0
    %1395 = vmatprep.subr.mxu0 0.0
    %1396 = vmatpush2.msra.mxu0 0.0
    %1397 = vmatprep.subr.mxu0 0.0
    %1398 = vmatpush2.msra.mxu0 0.0
    %1399 = vmatprep.mubr.f32.mxu0 0.0
    %1400 = vmatmul.mubr.f32.gmra.mxu0 %v1330
    %v1401 = vpop.f32.mrf.mxu0
    %v1402 = vadd.f32 0.0, %v1401
    %v1403 = vpop.f32.mrf.mxu0
    %1404 = vmatprep.mubr.f32.mxu0 0.0
    %1405 = vmatmul.mubr.f32.gmra.mxu0 %v1333
    %v1406 = vpop.f32.mrf.mxu0
    %v1407 = vadd.f32 0.0, %v1406
    %v1408 = vpop.f32.mrf.mxu0
    %1409 = vdwg.mxu0
    %v1410 = vmul.f32 %v1402, 0.5
    %v1411 = vmul.f32 %v1407, 0.5
    %v1412 = vmul.f32 %v1402, 0.70710677
    %v1413 = vmul.f32 %v1407, 0.70710677
    %v1414 = verf.f32.pop %v1412
    %v1415 = verf.f32.pop %v1413
    %v1416 = vadd.f32 %v1414, 1.0
    %v1417 = vadd.f32 %v1415, 1.0
    %v1418 = vmul.f32 %v1410, %v1416
    %v1419 = vmul.f32 %v1411, %v1417
    %1420 = vmatprep.subr.mxu0 0.0
    %1421 = vmatpush1.msra.mxu0 %v43
    %1422 = vmatprep.subr.mxu0 0.0
    %1423 = vmatpush1.msra.mxu0 %v42
    %1424 = vmatprep.subr.mxu0 0.0
    %1425 = vmatpush1.msra.mxu0 %v41
    %1426 = vmatprep.subr.mxu0 0.0
    %1427 = vmatpush1.msra.mxu0 %v40
    %1428 = vmatprep.subr.mxu0 0.0
    %1429 = vmatpush1.msra.mxu0 %v39
    %1430 = vmatprep.subr.mxu0 0.0
    %1431 = vmatpush1.msra.mxu0 %v38
    %1432 = vmatprep.subr.mxu0 0.0
    %1433 = vmatpush1.msra.mxu0 %v37
    %1434 = vmatprep.subr.mxu0 0.0
    %1435 = vmatpush1.msra.mxu0 %v36
    %1436 = vmatprep.subr.mxu0 0.0
    %1437 = vmatpush1.msra.mxu0 %v35
    %1438 = vmatprep.subr.mxu0 0.0
    %1439 = vmatpush1.msra.mxu0 %v34
    %1440 = vmatprep.subr.mxu0 0.0
    %1441 = vmatpush1.msra.mxu0 %v33
    %1442 = vmatprep.subr.mxu0 0.0
    %1443 = vmatpush1.msra.mxu0 %v32
    %1444 = vmatprep.subr.mxu0 0.0
    %1445 = vmatpush1.msra.mxu0 %v31
    %1446 = vmatprep.subr.mxu0 0.0
    %1447 = vmatpush1.msra.mxu0 %v30
    %1448 = vmatprep.subr.mxu0 0.0
    %1449 = vmatpush1.msra.mxu0 %v29
    %1450 = vmatprep.subr.mxu0 0.0
    %1451 = vmatpush1.msra.mxu0 %v28
    %1452 = vmatprep.subr.mxu0 0.0
    %1453 = vmatpush2.msra.mxu0 0.0
    %1454 = vmatprep.subr.mxu0 0.0
    %1455 = vmatpush2.msra.mxu0 0.0
    %1456 = vmatprep.subr.mxu0 0.0
    %1457 = vmatpush2.msra.mxu0 0.0
    %1458 = vmatprep.subr.mxu0 0.0
    %1459 = vmatpush2.msra.mxu0 0.0
    %1460 = vmatprep.subr.mxu0 0.0
    %1461 = vmatpush2.msra.mxu0 0.0
    %1462 = vmatprep.subr.mxu0 0.0
    %1463 = vmatpush2.msra.mxu0 0.0
    %1464 = vmatprep.subr.mxu0 0.0
    %1465 = vmatpush2.msra.mxu0 0.0
    %1466 = vmatprep.subr.mxu0 0.0
    %1467 = vmatpush2.msra.mxu0 0.0
    %1468 = vmatprep.subr.mxu0 0.0
    %1469 = vmatpush2.msra.mxu0 0.0
    %1470 = vmatprep.subr.mxu0 0.0
    %1471 = vmatpush2.msra.mxu0 0.0
    %1472 = vmatprep.subr.mxu0 0.0
    %1473 = vmatpush2.msra.mxu0 0.0
    %1474 = vmatprep.subr.mxu0 0.0
    %1475 = vmatpush2.msra.mxu0 0.0
    %1476 = vmatprep.subr.mxu0 0.0
    %1477 = vmatpush2.msra.mxu0 0.0
    %1478 = vmatprep.subr.mxu0 0.0
    %1479 = vmatpush2.msra.mxu0 0.0
    %1480 = vmatprep.subr.mxu0 0.0
    %1481 = vmatpush2.msra.mxu0 0.0
    %1482 = vmatprep.subr.mxu0 0.0
    %1483 = vmatpush2.msra.mxu0 0.0
    %1484 = vmatprep.mubr.f32.mxu0 0.0
    %1485 = vmatmul.mubr.f32.gmra.mxu0 %v1418
    %v1486 = vpop.f32.mrf.mxu0
    %v1487 = vadd.f32 0.0, %v1486
    %v1488 = vpop.f32.mrf.mxu0
    %1489 = vmatprep.mubr.f32.mxu0 0.0
    %1490 = vmatmul.mubr.f32.gmra.mxu0 %v1419
    %v1491 = vpop.f32.mrf.mxu0
    %v1492 = vadd.f32 0.0, %v1491
    %v1493 = vpop.f32.mrf.mxu0
    %1494 = vdwg.mxu0
    %v1495 = vadd.f32 %v1301, %v1487
    %v1496 = vadd.f32 %v1302, %v1492
    %1497 = vst.msk [vmem:[#allocation2] sm:$0xff] %vm48, %v1495
    %1498 = vst.msk [vmem:[#allocation2 + $0x8] sm:$0xff] %vm48, %v1496
    // Predicated region
    $region18: #{tpu_custom_call.1} parent=1 // pred_check
      _
    $region19: #{tpu_custom_call.1} parent=1 // pred_check_branch
      %1500 = sbr.rel (0) target = $region21
    $region20: #{tpu_custom_call.1} parent=1 // pred_region
      %s1502 = ssub.s32 256, 256
      %1503 = vsyncadd [#allocation3], %s1502
      %s1504 = sshll.u32 [#allocation2], 4
      %s1505 = int_to_ptr.vmem [resolvable:$true] %s1504
      %1510 = dma.vmem_to_hbm [thread:$0]  %s1505, 256, %s4, [#allocation3], 128, 128, 8
    $region21: #{tpu_custom_call.1} parent=1 // pred_fallthru
      _
    // Predicated region
    $region22: #{tpu_custom_call.1} parent=1 // pred_check
      _
    $region23: #{tpu_custom_call.1} parent=1 // pred_check_branch
      %1512 = sbr.rel (0) target = $region25
    $region24: #{tpu_custom_call.1} parent=1 // pred_region
      %1513 = dma.done [#allocation3], 256
    $region25: #{tpu_custom_call.1} parent=1 // pred_fallthru
      _
    %1514 = vsyncpa [#allocation3], 1

</llo_original>
